<compile_context>
chip_gen: v6e
topology: v6e:2x2x1
jax: 0.10.0
libtpu: 0.0.40
codegen_flags: <defaults>
</compile_context>

<pallas_src>
import jax
import jax.numpy as jnp
from jax.experimental import pallas as pl
from jax.experimental.pallas import tpu as pltpu

_LN_EPS = 1e-5  # torch.nn.LayerNorm default


# --------------------------------------------------------------------------- #
# Stage 1: attr (B, n_attrs, dim_in) -> rows (B, dim_out)
# --------------------------------------------------------------------------- #
def attr_rows_kernel(attr_ref, w1_ref, b1_ref, w2_ref, b2_ref, rows_ref):
    attr = attr_ref[...].astype(jnp.float32)            # (TB, n_attrs, dim_in)
    pooled = jnp.mean(attr, axis=1)                      # (TB, dim_in)

    # LayerNorm statistics; the per-slice affine is folded into W1/b1 (wrapper).
    mu = jnp.mean(pooled, axis=-1, keepdims=True)
    var = jnp.mean(jnp.square(pooled - mu), axis=-1, keepdims=True)
    norm = (pooled - mu) * jax.lax.rsqrt(var + _LN_EPS)  # (TB, dim_in)

    # Fused Linear1 of all slices: (TB, dim_in) @ (dim_in, n_slices*hidden).
    h = jnp.dot(norm.astype(w1_ref.dtype), w1_ref[...],
                preferred_element_type=jnp.float32) + b1_ref[...]
    # TODO(synk): PyTorch nn.GELU() is the exact erf form; tanh approximation is
    # used for guaranteed Mosaic lowering (~1e-3 deviation).
    h = jax.nn.gelu(h, approximate=True)

    # Fused Linear2 (block-diagonal): (TB, n_slices*hidden) @ (n_slices*hidden, dim_out).
    p = jnp.dot(h.astype(w2_ref.dtype), w2_ref[...],
                preferred_element_type=jnp.float32) + b2_ref[...]
    rows_ref[...] = p.astype(rows_ref.dtype)             # lane-dense (TB, dim_out)


# --------------------------------------------------------------------------- #
# Stage 2: rows (B, dim_out) -> out (B, length, dim_out)   [pure broadcast store]
# --------------------------------------------------------------------------- #
def broadcast_rows_kernel(rows_ref, o_ref):
    tb, tl, d = o_ref.shape
    n_full, rem = divmod(tl, 8)

    def emit_row(b):
        row = rows_ref[b, :][None, :]                     # (1, d)
        chunk = jnp.broadcast_to(row, (8, d))             # sublane-full chunk (6 vregs @ d=768 f32)
        if n_full:
            @pl.loop(0, n_full)
            def _store(j):
                off = pl.multiple_of(j * 8, 8)
                o_ref[b, pl.ds(off, 8), :] = chunk
        if rem:                                           # masked tail (tl not multiple of 8)
            o_ref[b, n_full * 8:tl, :] = jnp.broadcast_to(row, (rem, d))

    if tb <= 16:                                          # small batch tiles: unroll
        for b in range(tb):
            emit_row(b)
    else:                                                 # keep code size bounded otherwise
        @pl.loop(0, tb)
        def _rows(b):
            emit_row(b)


# --------------------------------------------------------------------------- #
# Parameter folding / tile selection
# --------------------------------------------------------------------------- #
def _fold_params(gamma, beta, w1, b1, w2, b2, param_dtype):
    """Fold LN affine into Linear1 and fuse the 4 slices into two lane-dense mats."""
    n_slices, dim_in = gamma.shape
    hidden = w1.shape[2]
    piece = w2.shape[2]
    gamma = gamma.astype(jnp.float32)
    beta = beta.astype(jnp.float32)
    w1 = w1.astype(jnp.float32)
    b1 = b1.astype(jnp.float32)
    w2 = w2.astype(jnp.float32)
    b2 = b2.astype(jnp.float32)

    # W1f[:, s*hidden:(s+1)*hidden] = gamma_s[:, None] * W1_s
    w1f = jnp.transpose(gamma[:, :, None] * w1, (1, 0, 2)).reshape(dim_in, n_slices * hidden)
    b1f = (jnp.einsum('sd,sdh->sh', beta, w1) + b1).reshape(1, n_slices * hidden)
    # Block-diagonal W2 so all slices finish in one lane-dense matmul.
    w2bd = jnp.zeros((n_slices * hidden, n_slices * piece), jnp.float32)
    for s in range(n_slices):
        w2bd = w2bd.at[s * hidden:(s + 1) * hidden, s * piece:(s + 1) * piece].set(w2[s])
    b2f = b2.reshape(1, n_slices * piece)
    return w1f.astype(param_dtype), b1f, w2bd.astype(param_dtype), b2f


def _pick_batch_tile(B, cap=128):
    """Batch tile for the compute stage: B itself if small, else a multiple-of-8 divisor."""
    if B <= cap:
        return B
    for t in range(cap - (cap % 8), 7, -8):
        if B % t == 0:
            return t
    return B


def _pick_block_len(length, tb, dim_out, *, itemsize=4, target_bytes=6 << 20, min_tiles=1):
    """Largest length tile dividing `length`, multiple of 8 (or == length), under the
    byte budget, preferring >= min_tiles tiles so the length axis can shard cores."""
    cap = max(1, target_bytes // max(1, tb * dim_out * itemsize))
    best = None
    for tl in range(min(length, cap), 0, -1):
        if length % tl:
            continue
        if tl % 8 and tl != length:
            continue
        if best is None:
            best = tl
        if length // tl >= min_tiles:
            return tl
    return best if best is not None else length


# --------------------------------------------------------------------------- #
# Wrapper
# --------------------------------------------------------------------------- #
def attr_projector(attr, gamma, beta, w1, b1, w2, b2, length, *,
                   n_attrs=1, param_dtype=jnp.bfloat16,
                   block_b_rows=None, block_b_out=None, block_len=None):
    """attr: (B, n_attrs * dim_in). Returns (B, length, dim_out) float32."""
    B = attr.shape[0]
    n_slices, dim_in = gamma.shape
    hidden = w1.shape[2]
    piece = w2.shape[2]
    dim_out = n_slices * piece
    assert attr.shape[1] == n_attrs * dim_in

    attr3 = attr.reshape(B, n_attrs, dim_in).astype(jnp.float32)
    w1f, b1f, w2bd, b2f = _fold_params(gamma, beta, w1, b1, w2, b2, param_dtype)

    # ---- stage 1: compute the projected rows once per batch element -----------------
    tb1 = block_b_rows if block_b_rows is not None else _pick_batch_tile(B)
    assert B % tb1 == 0
    rows = pl.pallas_call(
        attr_rows_kernel,
        out_shape=jax.ShapeDtypeStruct((B, dim_out), jnp.float32),
        grid=(B // tb1,),
        in_specs=[
            pl.BlockSpec((tb1, n_attrs, dim_in), lambda b: (b, 0, 0)),
            # Constant-index weights: single-buffered (pl.Buffered(1)) to halve VMEM.
            pl.BlockSpec((dim_in, n_slices * hidden), lambda b: (0, 0),
                         pipeline_mode=pl.Buffered(1)),
            pl.BlockSpec((1, n_slices * hidden), lambda b: (0, 0),
                         pipeline_mode=pl.Buffered(1)),
            pl.BlockSpec((n_slices * hidden, dim_out), lambda b: (0, 0),
                         pipeline_mode=pl.Buffered(1)),
            pl.BlockSpec((1, dim_out), lambda b: (0, 0),
                         pipeline_mode=pl.Buffered(1)),
        ],
        out_specs=pl.BlockSpec((tb1, dim_out), lambda b: (b, 0)),
        compiler_params=pltpu.CompilerParams(
            dimension_semantics=("parallel",),
            vmem_limit_bytes=32 * 1024 * 1024,
        ),
    )(attr3, w1f, b1f, w2bd, b2f)

    # ---- stage 2: broadcast-store at the HBM-write roofline --------------------------
    tb2 = block_b_out if block_b_out is not None else (8 if B % 8 == 0 else B)
    assert B % tb2 == 0
    min_tiles = 2 if (B // tb2) < 2 and length > 1 else 1
    tl = block_len if block_len is not None else _pick_block_len(
        length, tb2, dim_out, min_tiles=min_tiles)
    assert length % tl == 0, "block_len must divide length"

    return pl.pallas_call(
        broadcast_rows_kernel,
        out_shape=jax.ShapeDtypeStruct((B, length, dim_out), jnp.float32),
        grid=(B // tb2, length // tl),
        in_specs=[pl.BlockSpec((tb2, dim_out), lambda b, l: (b, 0))],
        out_specs=pl.BlockSpec((tb2, tl, dim_out), lambda b, l: (b, l, 0)),
        compiler_params=pltpu.CompilerParams(
            dimension_semantics=("parallel", "parallel"),
            vmem_limit_bytes=32 * 1024 * 1024,
        ),
    )(rows)


# --------------------------------------------------------------------------- #
# References
# --------------------------------------------------------------------------- #
def attr_projector_ref(attr, gamma, beta, w1, b1, w2, b2, length, *, n_attrs=1):
    """PyTorch-faithful reference: f32 everywhere, exact (erf) GELU."""
    B = attr.shape[0]
    n_slices, dim_in = gamma.shape
    tokens = attr.reshape(B, n_attrs, dim_in).astype(jnp.float32)
    pooled = tokens.mean(axis=1)
    mu = pooled.mean(axis=-1, keepdims=True)
    var = jnp.mean(jnp.square(pooled - mu), axis=-1, keepdims=True)
    norm = (pooled - mu) / jnp.sqrt(var + _LN_EPS)
    hi = jax.lax.Precision.HIGHEST
    pieces = []
    for s in range(n_slices):
        x = norm * gamma[s] + beta[s]
        h = jax.nn.gelu(jnp.dot(x, w1[s], precision=hi) + b1[s], approximate=False)
        pieces.append(jnp.dot(h, w2[s], precision=hi) + b2[s])
    out = jnp.concatenate(pieces, axis=-1)
    return jnp.broadcast_to(out[:, None, :], (B, length, out.shape[-1]))


def attr_projector_mirror_ref(attr, gamma, beta, w1, b1, w2, b2, length, *,
                              n_attrs=1, param_dtype=jnp.bfloat16):
    """Mirror of the kernel math (folded bf16 params, tanh GELU) for a tight check."""
    B = attr.shape[0]
    n_slices, dim_in = gamma.shape
    w1f, b1f, w2bd, b2f = _fold_params(gamma, beta, w1, b1, w2, b2, param_dtype)
    tokens = attr.reshape(B, n_attrs, dim_in).astype(jnp.float32)
    pooled = tokens.mean(axis=1)
    mu = pooled.mean(axis=-1, keepdims=True)
    var = jnp.mean(jnp.square(pooled - mu), axis=-1, keepdims=True)
    norm = (pooled - mu) * jax.lax.rsqrt(var + _LN_EPS)
    hi = jax.lax.Precision.HIGHEST
    h = jnp.dot(norm.astype(param_dtype).astype(jnp.float32),
                w1f.astype(jnp.float32), precision=hi) + b1f
    h = jax.nn.gelu(h, approximate=True)
    p = jnp.dot(h.astype(param_dtype).astype(jnp.float32),
                w2bd.astype(jnp.float32), precision=hi) + b2f
    return jnp.broadcast_to(p[:, None, :], (B, length, p.shape[-1]))


# --------------------------------------------------------------------------- #
if __name__ == "__main__":
    # Small shapes consistent with the module: dim_out % n_slices == 0,
    # hidden = dim_in (hidden_mult = 1.0), lane-dense dims (multiples of 128).
    B, n_attrs = 2, 2
    dim_in = 256
    dim_out = 256
    n_slices = 4
    piece_dim = dim_out // n_slices
    hidden = int(dim_in * 1.0)
    length = 96

    key = jax.random.PRNGKey(0)
    keys = jax.random.split(key, 7)
    attr = jax.random.normal(keys[0], (B, n_attrs * dim_in), dtype=jnp.float32)

    # Per-slice parameters stacked on a leading n_slices axis; Linear weights are
    # stored (in_features, out_features), i.e. pre-transposed vs PyTorch.
    gamma = (jnp.ones((n_slices, dim_in), jnp.float32)
             + 0.1 * jax.random.normal(keys[1], (n_slices, dim_in), jnp.float32))
    beta = 0.1 * jax.random.normal(keys[2], (n_slices, dim_in), jnp.float32)
    s1 = 1.0 / dim_in ** 0.5
    s2 = 1.0 / hidden ** 0.5
    w1 = jax.random.uniform(keys[3], (n_slices, dim_in, hidden), jnp.float32, -s1, s1)
    b1 = jax.random.uniform(keys[4], (n_slices, hidden), jnp.float32, -s1, s1)
    w2 = jax.random.uniform(keys[5], (n_slices, hidden, piece_dim), jnp.float32, -s2, s2)
    b2 = jax.random.uniform(keys[6], (n_slices, piece_dim), jnp.float32, -s2, s2)

    out = attr_projector(attr, gamma, beta, w1, b1, w2, b2, length, n_attrs=n_attrs)
    out = jax.block_until_ready(out)
    assert out.shape == (B, length, dim_out)

    # (a) Structural check vs a mirror of the kernel math (same folded bf16 params,
    #     tanh GELU): only accumulation-order differences remain.
    mirror = attr_projector_mirror_ref(attr, gamma, beta, w1, b1, w2, b2, length,
                                       n_attrs=n_attrs)
    err_mirror = float(jnp.max(jnp.abs(out - mirror)))
    assert err_mirror < 2e-3, f"mirror mismatch: {err_mirror}"

    # (b) Semantic check vs the f32 / erf-GELU PyTorch-faithful reference
    #     (deviation stems from bf16 weights + tanh GELU, ~1e-2 at these scales).
    ref = attr_projector_ref(attr, gamma, beta, w1, b1, w2, b2, length, n_attrs=n_attrs)
    err_ref = float(jnp.max(jnp.abs(out - ref)))
    assert err_ref < 3e-2, f"reference mismatch: {err_ref}"

    print("KERNEL_OK")
</pallas_src>

<mosaic_0001>
module attributes {stable_mosaic.version = 11 : i64} {
  func.func @attr_rows_kernel(%arg0: i32, %arg1: memref<2x2x256xf32, #tpu.memory_space<vmem>>, %arg2: memref<256x1024xbf16, #tpu.memory_space<vmem>>, %arg3: memref<1x1024xf32, #tpu.memory_space<vmem>>, %arg4: memref<1024x256xbf16, #tpu.memory_space<vmem>>, %arg5: memref<1x256xf32, #tpu.memory_space<vmem>>, %arg6: memref<2x256xf32, #tpu.memory_space<vmem>>) attributes {dimension_semantics = [#tpu.dimension_semantics<parallel>], iteration_bounds = array<i64: 1>, scalar_prefetch = 0 : i64, scratch_operands = 0 : i64, tpu.core_type = #tpu.core_type<tc>, window_params = [{transform_indices = @transform_0, window_bounds = array<i64: 2, 2, 256>}, {pipeline_mode = #tpu.pipeline_mode<synchronous>, transform_indices = @transform_1, window_bounds = array<i64: 256, 1024>}, {pipeline_mode = #tpu.pipeline_mode<synchronous>, transform_indices = @transform_2, window_bounds = array<i64: 1, 1024>}, {pipeline_mode = #tpu.pipeline_mode<synchronous>, transform_indices = @transform_3, window_bounds = array<i64: 1024, 256>}, {pipeline_mode = #tpu.pipeline_mode<synchronous>, transform_indices = @transform_4, window_bounds = array<i64: 1, 256>}, {transform_indices = @transform_5, window_bounds = array<i64: 2, 256>}]} {
    %c0 = arith.constant 0 : index
    %c0_0 = arith.constant 0 : index
    %c0_1 = arith.constant 0 : index
    %0 = vector.load %arg1[%c0, %c0_0, %c0_1] : memref<2x2x256xf32, #tpu.memory_space<vmem>>, vector<2x2x256xf32>
    %cst = arith.constant dense<0.000000e+00> : vector<2x256xf32>
    %1 = vector.multi_reduction <add>, %0, %cst [1] : vector<2x2x256xf32> to vector<2x256xf32>
    %cst_2 = arith.constant 2.000000e+00 : f32
    %2 = vector.broadcast %cst_2 : f32 to vector<2x256xf32>
    %3 = arith.divf %1, %2 : vector<2x256xf32>
    %cst_3 = arith.constant dense<0.000000e+00> : vector<2xf32>
    %4 = vector.multi_reduction <add>, %3, %cst_3 [1] : vector<2x256xf32> to vector<2xf32>
    %5 = vector.shape_cast %4 : vector<2xf32> to vector<2x1xf32>
    %cst_4 = arith.constant 2.560000e+02 : f32
    %6 = vector.broadcast %cst_4 : f32 to vector<2x1xf32>
    %7 = arith.divf %5, %6 : vector<2x1xf32>
    %8 = vector.broadcast %7 : vector<2x1xf32> to vector<2x256xf32>
    %9 = arith.subf %3, %8 : vector<2x256xf32>
    %10 = arith.mulf %9, %9 : vector<2x256xf32>
    %cst_5 = arith.constant dense<0.000000e+00> : vector<2xf32>
    %11 = vector.multi_reduction <add>, %10, %cst_5 [1] : vector<2x256xf32> to vector<2xf32>
    %12 = vector.shape_cast %11 : vector<2xf32> to vector<2x1xf32>
    %cst_6 = arith.constant 2.560000e+02 : f32
    %13 = vector.broadcast %cst_6 : f32 to vector<2x1xf32>
    %14 = arith.divf %12, %13 : vector<2x1xf32>
    %15 = vector.broadcast %7 : vector<2x1xf32> to vector<2x256xf32>
    %16 = arith.subf %3, %15 : vector<2x256xf32>
    %cst_7 = arith.constant 9.99999974E-6 : f32
    %17 = vector.broadcast %cst_7 : f32 to vector<2x1xf32>
    %18 = arith.addf %14, %17 : vector<2x1xf32>
    %19 = math.rsqrt %18 : vector<2x1xf32>
    %20 = vector.broadcast %19 : vector<2x1xf32> to vector<2x256xf32>
    %21 = arith.mulf %16, %20 : vector<2x256xf32>
    %22 = arith.truncf %21 : vector<2x256xf32> to vector<2x256xbf16>
    %c0_8 = arith.constant 0 : index
    %c0_9 = arith.constant 0 : index
    %23 = vector.load %arg2[%c0_8, %c0_9] : memref<256x1024xbf16, #tpu.memory_space<vmem>>, vector<256x1024xbf16>
    %cst_10 = arith.constant dense<0.000000e+00> : vector<2x1024xf32>
    %24 = tpu.matmul %22, %23, %cst_10 {dimension_numbers = #tpu.dot_dimension_numbers<[1], [0], [0], [1], [0, 0, 1, 1], [], []>} : vector<2x256xbf16>, vector<256x1024xbf16>, vector<2x1024xf32> -> vector<2x1024xf32>
    %c0_11 = arith.constant 0 : index
    %c0_12 = arith.constant 0 : index
    %25 = vector.load %arg3[%c0_11, %c0_12] : memref<1x1024xf32, #tpu.memory_space<vmem>>, vector<1x1024xf32>
    %26 = vector.broadcast %25 : vector<1x1024xf32> to vector<2x1024xf32>
    %27 = arith.addf %24, %26 : vector<2x1024xf32>
    %28 = arith.mulf %27, %27 : vector<2x1024xf32>
    %29 = arith.mulf %27, %28 : vector<2x1024xf32>
    %cst_13 = arith.constant 4.471500e-02 : f32
    %30 = vector.broadcast %cst_13 : f32 to vector<2x1024xf32>
    %31 = arith.mulf %30, %29 : vector<2x1024xf32>
    %32 = arith.addf %27, %31 : vector<2x1024xf32>
    %cst_14 = arith.constant 0.797884583 : f32
    %33 = vector.broadcast %cst_14 : f32 to vector<2x1024xf32>
    %34 = arith.mulf %33, %32 : vector<2x1024xf32>
    %35 = math.tanh %34 : vector<2x1024xf32>
    %cst_15 = arith.constant 1.000000e+00 : f32
    %36 = vector.broadcast %cst_15 : f32 to vector<2x1024xf32>
    %37 = arith.addf %36, %35 : vector<2x1024xf32>
    %cst_16 = arith.constant 5.000000e-01 : f32
    %38 = vector.broadcast %cst_16 : f32 to vector<2x1024xf32>
    %39 = arith.mulf %38, %37 : vector<2x1024xf32>
    %40 = arith.mulf %27, %39 : vector<2x1024xf32>
    %41 = arith.truncf %40 : vector<2x1024xf32> to vector<2x1024xbf16>
    %c0_17 = arith.constant 0 : index
    %c0_18 = arith.constant 0 : index
    %42 = vector.load %arg4[%c0_17, %c0_18] : memref<1024x256xbf16, #tpu.memory_space<vmem>>, vector<1024x256xbf16>
    %cst_19 = arith.constant dense<0.000000e+00> : vector<2x256xf32>
    %43 = tpu.matmul %41, %42, %cst_19 {dimension_numbers = #tpu.dot_dimension_numbers<[1], [0], [0], [1], [0, 0, 1, 1], [], []>} : vector<2x1024xbf16>, vector<1024x256xbf16>, vector<2x256xf32> -> vector<2x256xf32>
    %c0_20 = arith.constant 0 : index
    %c0_21 = arith.constant 0 : index
    %44 = vector.load %arg5[%c0_20, %c0_21] : memref<1x256xf32, #tpu.memory_space<vmem>>, vector<1x256xf32>
    %45 = vector.broadcast %44 : vector<1x256xf32> to vector<2x256xf32>
    %46 = arith.addf %43, %45 : vector<2x256xf32>
    %c0_22 = arith.constant 0 : index
    %c0_23 = arith.constant 0 : index
    %47 = vector.load %arg6[%c0_22, %c0_23] : memref<2x256xf32, #tpu.memory_space<vmem>>, vector<2x256xf32>
    tpu.vector_store %arg6[%c0_22, %c0_23], %46 {strides = array<i32>} : memref<2x256xf32, #tpu.memory_space<vmem>>, vector<2x256xf32>,
    return
  }
  func.func @transform_0(%arg0: i32) -> (i32, i32, i32) {
    %c0_i32 = arith.constant 0 : i32
    %c0_i32_0 = arith.constant 0 : i32
    %c0_i32_1 = arith.constant 0 : i32
    return %arg0, %c0_i32, %c0_i32_0 : i32, i32, i32
  }
  func.func @transform_1(%arg0: i32) -> (i32, i32) {
    %c0_i32 = arith.constant 0 : i32
    %c0_i32_0 = arith.constant 0 : i32
    %c0_i32_1 = arith.constant 0 : i32
    return %c0_i32, %c0_i32_0 : i32, i32
  }
  func.func @transform_2(%arg0: i32) -> (i32, i32) {
    %c0_i32 = arith.constant 0 : i32
    %c0_i32_0 = arith.constant 0 : i32
    %c0_i32_1 = arith.constant 0 : i32
    return %c0_i32, %c0_i32_0 : i32, i32
  }
  func.func @transform_3(%arg0: i32) -> (i32, i32) {
    %c0_i32 = arith.constant 0 : i32
    %c0_i32_0 = arith.constant 0 : i32
    %c0_i32_1 = arith.constant 0 : i32
    return %c0_i32, %c0_i32_0 : i32, i32
  }
  func.func @transform_4(%arg0: i32) -> (i32, i32) {
    %c0_i32 = arith.constant 0 : i32
    %c0_i32_0 = arith.constant 0 : i32
    %c0_i32_1 = arith.constant 0 : i32
    return %c0_i32, %c0_i32_0 : i32, i32
  }
  func.func @transform_5(%arg0: i32) -> (i32, i32) {
    %c0_i32 = arith.constant 0 : i32
    %c0_i32_0 = arith.constant 0 : i32
    return %arg0, %c0_i32 : i32, i32
  }
}

</mosaic_0001>

<llo_original>
// kernel: tpu_custom_call.1
$region0: #{tpu_custom_call.1}
  #allocation0 [shape = 'u32[]', space=smem, size = 0x4, offset = 0x4, fixed_abs, tag = 'smem constant byte address 0x4 - core index']
  #allocation1 [shape = 'u32[144,128]{1,0:T(1,128)}', space=vmem, size = 0x12000, scoped, tag = 'internal scratch']
  %s0 = inlined_call_operand.hbm [shape: f32[2,2,256], index: 0, kind: input, shape index: {}]
  %s1 = inlined_call_operand.hbm [shape: bf16[256,1024], index: 1, kind: input, shape index: {}]
  %s2 = inlined_call_operand.hbm [shape: f32[1,1024], index: 2, kind: input, shape index: {}]
  %s3 = inlined_call_operand.hbm [shape: bf16[1024,256], index: 3, kind: input, shape index: {}]
  %s4 = inlined_call_operand.vmem [shape: f32[1,256], index: 4, kind: input, shape index: {}]
  %s5 = inlined_call_operand.hbm [shape: f32[2,256], index: 5, kind: output, shape index: {}]
  %s6 = sld [smem:[#allocation0]]
  $region46: #{tpu_custom_call.1} parent=0
    _
  %s8 = ssub.s32 1, %s6
  %s9 = scalar_select 0, %s8, %s6
  $region1: #{tpu_custom_call.1} parent=0
    #allocation2 [shape = 'u8[4096]{0}', space=vmem, size = 0x1000, scoped, tag = 'input window, operand 0, single buffered']
    #allocation3 [shape = 's32[1]{0}', space=sflag, size = 0x4, scoped, tag = 'scoped memory for tpu_custom_call.1']
    #allocation4 [shape = 's32[1]{0}', space=sflag, size = 0x4, scoped, tag = 'scoped memory for tpu_custom_call.1']
    #allocation5 [shape = 'u8[524288]{0}', space=vmem, size = 0x80000, scoped, tag = 'input window, operand 1, single buffered']
    #allocation6 [shape = 's32[1]{0}', space=sflag, size = 0x4, scoped, tag = 'scoped memory for tpu_custom_call.1']
    #allocation7 [shape = 'u8[4096]{0}', space=vmem, size = 0x1000, scoped, tag = 'input window, operand 2, single buffered']
    #allocation8 [shape = 'u8[524288]{0}', space=vmem, size = 0x80000, scoped, tag = 'input window, operand 3, single buffered']
    #allocation9 [shape = 's32[1]{0}', space=sflag, size = 0x4, scoped, tag = 'scoped memory for tpu_custom_call.1']
    #allocation10 [shape = 'u8[2048]{0}', space=vmem, size = 0x800, scoped, tag = 'output window, operand 0, single buffered']
    %10 = vsyncpa [#allocation3], 0
    %11 = vsyncpa [#allocation6], 0
    %12 = vsyncpa [#allocation9], 0
    %13 = vsyncpa [#allocation4], 0
    // Predicated region
    $region2: #{tpu_custom_call.1} parent=1 // pred_check
      _
    $region3: #{tpu_custom_call.1} parent=1 // pred_check_branch
      %15 = sbr.rel (0) target = $region5
    $region4: #{tpu_custom_call.1} parent=1 // pred_region
      %s17 = ssub.s32 128, 128
      %18 = vsyncadd [#allocation3], %s17
      %s19 = sshll.u32 [#allocation2], 4
      %s20 = int_to_ptr.vmem [resolvable:$true] %s19
      %25 = dma.hbm_to_vmem [thread:$0]  %s0, 128, %s20, [#allocation3], 64, 64, 4
    $region5: #{tpu_custom_call.1} parent=1 // pred_fallthru
      _
    // Predicated region
    $region6: #{tpu_custom_call.1} parent=1 // pred_check
      _
    $region7: #{tpu_custom_call.1} parent=1 // pred_check_branch
      %27 = sbr.rel (0) target = $region9
    $region8: #{tpu_custom_call.1} parent=1 // pred_region
      %s29 = ssub.s32 16384, 16384
      %30 = vsyncadd [#allocation6], %s29
      %s31 = sshll.u32 [#allocation5], 4
      %s32 = int_to_ptr.vmem [resolvable:$true] %s31
      %37 = dma.hbm_to_vmem [thread:$0]  %s1, 16384, %s32, [#allocation6], 512, 512, 32
    $region9: #{tpu_custom_call.1} parent=1 // pred_fallthru
      _
    // Predicated region
    $region10: #{tpu_custom_call.1} parent=1 // pred_check
      _
    $region11: #{tpu_custom_call.1} parent=1 // pred_check_branch
      %39 = sbr.rel (0) target = $region13
    $region12: #{tpu_custom_call.1} parent=1 // pred_region
      %s41 = ssub.s32 128, 128
      %42 = vsyncadd [#allocation6], %s41
      %s44 = sshll.u32 [#allocation7], 4
      %s45 = int_to_ptr.vmem [resolvable:$true] %s44
      %47 = dma.hbm_to_vmem [thread:$0]  %s2, 128, %s45, [#allocation6]
    $region13: #{tpu_custom_call.1} parent=1 // pred_fallthru
      _
    // Predicated region
    $region14: #{tpu_custom_call.1} parent=1 // pred_check
      _
    $region15: #{tpu_custom_call.1} parent=1 // pred_check_branch
      %49 = sbr.rel (0) target = $region17
    $region16: #{tpu_custom_call.1} parent=1 // pred_region
      %s51 = ssub.s32 16384, 16384
      %52 = vsyncadd [#allocation9], %s51
      %s53 = sshll.u32 [#allocation8], 4
      %s54 = int_to_ptr.vmem [resolvable:$true] %s53
      %59 = dma.hbm_to_vmem [thread:$0]  %s3, 16384, %s54, [#allocation9], 128, 128, 8
    $region17: #{tpu_custom_call.1} parent=1 // pred_fallthru
      _
    // Predicated region
    $region18: #{tpu_custom_call.1} parent=1 // pred_check
      _
    $region19: #{tpu_custom_call.1} parent=1 // pred_check_branch
      %61 = sbr.rel (0) target = $region21
    $region20: #{tpu_custom_call.1} parent=1 // pred_region
      _
    $region21: #{tpu_custom_call.1} parent=1 // pred_fallthru
      _
    // Predicated region
    $region22: #{tpu_custom_call.1} parent=1 // pred_check
      _
    $region23: #{tpu_custom_call.1} parent=1 // pred_check_branch
      %63 = sbr.rel (0) target = $region25
    $region24: #{tpu_custom_call.1} parent=1 // pred_region
      %64 = dma.done [#allocation3], 128
    $region25: #{tpu_custom_call.1} parent=1 // pred_fallthru
      _
    // Predicated region
    $region26: #{tpu_custom_call.1} parent=1 // pred_check
      _
    $region27: #{tpu_custom_call.1} parent=1 // pred_check_branch
      %66 = sbr.rel (0) target = $region29
    $region28: #{tpu_custom_call.1} parent=1 // pred_region
      %67 = dma.done [#allocation6], 16384
    $region29: #{tpu_custom_call.1} parent=1 // pred_fallthru
      _
    // Predicated region
    $region30: #{tpu_custom_call.1} parent=1 // pred_check
      _
    $region31: #{tpu_custom_call.1} parent=1 // pred_check_branch
      %69 = sbr.rel (0) target = $region33
    $region32: #{tpu_custom_call.1} parent=1 // pred_region
      %70 = dma.done [#allocation6], 128
    $region33: #{tpu_custom_call.1} parent=1 // pred_fallthru
      _
    // Predicated region
    $region34: #{tpu_custom_call.1} parent=1 // pred_check
      _
    $region35: #{tpu_custom_call.1} parent=1 // pred_check_branch
      %72 = sbr.rel (0) target = $region37
    $region36: #{tpu_custom_call.1} parent=1 // pred_region
      %73 = dma.done [#allocation9], 16384
    $region37: #{tpu_custom_call.1} parent=1 // pred_fallthru
      _
    %v74 = vld [vmem:[#allocation2] sm:$0xf]
    %v75 = vld [vmem:[#allocation2 + $0x4] sm:$0xf]
    %v79 = vunpack.c.l.s4 1983009808
    %v80 = vunpack.c.0.s8 %v79
    %v81 = vlaneseq
    %v82 = vshrl.u32 %v81, 7
    %v83 = vsub.s32 %v80, %v82
    %v84 = vrot.slane %v74, %v83
    %v85 = vcombine.high %v84, %v84
    %v87 = vunpack.c.l.s4 1983009808
    %v88 = vunpack.c.0.s8 %v87
    %v89 = vlaneseq
    %v90 = vshrl.u32 %v89, 7
    %v91 = vsub.s32 %v88, %v90
    %v92 = vrot.slane %v75, %v91
    %v93 = vcombine.high %v92, %v92
    %vm98 = vcmask 1041408
    %v99 = vsel %vm98, %v84, 0.0
    %v100 = vrot.slane %v99, 4
    %v101 = vadd.f32 %v99, %v100
    %v102 = vrot.slane %v101, 2
    %v103 = vadd.f32 %v101, %v102
    %v104 = vrot.slane %v103, 1
    %v105 = vadd.f32 %v103, %v104
    %v106 = vsel %vm98, %v85, 0.0
    %v107 = vrot.slane %v106, 4
    %v108 = vadd.f32 %v106, %v107
    %v109 = vrot.slane %v108, 2
    %v110 = vadd.f32 %v108, %v109
    %v111 = vrot.slane %v110, 1
    %v112 = vadd.f32 %v110, %v111
    %v113 = vsel %vm98, %v92, 0.0
    %v114 = vrot.slane %v113, 4
    %v115 = vadd.f32 %v113, %v114
    %v116 = vrot.slane %v115, 2
    %v117 = vadd.f32 %v115, %v116
    %v118 = vrot.slane %v117, 1
    %v119 = vadd.f32 %v117, %v118
    %v120 = vsel %vm98, %v93, 0.0
    %v121 = vrot.slane %v120, 4
    %v122 = vadd.f32 %v120, %v121
    %v123 = vrot.slane %v122, 2
    %v124 = vadd.f32 %v122, %v123
    %v125 = vrot.slane %v124, 1
    %v126 = vadd.f32 %v124, %v125
    %v127 = vrcp.pop 2.0
    %v128 = vmul.f32 %v105, %v127
    %v129 = vmul.f32 %v112, %v127
    %v130 = vmul.f32 %v119, %v127
    %v131 = vmul.f32 %v126, %v127
    %vm136 = vcmask 1041409
    %v137 = vsel %vm136, %v130, %v128
    %v138 = vsel %vm136, %v131, %v129
    %v141 = vsel %vm98, %v137, 0.0
    %v142 = vsel %vm98, %v138, 0.0
    %v143 = vadd.f32 %v141, %v142
    %144 = vadd.xlane.f32.xlu0 %v143
    %v145 = vpop.xlane.xlu0 %144
    %v146 = vrcp.pop 256.0
    %v147 = vmul.f32 %v145, %v146
    %v149 = vrot.slane %v147, 1
    %v152 = vsub.f32 %v128, %v147
    %v153 = vsub.f32 %v129, %v147
    %v154 = vsub.f32 %v130, %v149
    %v155 = vsub.f32 %v131, %v149
    %v156 = vmul.f32 %v152, %v152
    %v157 = vmul.f32 %v153, %v153
    %v158 = vmul.f32 %v154, %v154
    %v159 = vmul.f32 %v155, %v155
    %v164 = vrot.slane %v158, 7
    %v165 = vsel %vm136, %v164, %v156
    %v166 = vrot.slane %v159, 7
    %v167 = vsel %vm136, %v166, %v157
    %v170 = vsel %vm98, %v165, 0.0
    %v171 = vsel %vm98, %v167, 0.0
    %v172 = vadd.f32 %v170, %v171
    %173 = vadd.xlane.f32.xlu0 %v172
    %v174 = vpop.xlane.xlu0 %173
    %v175 = vmul.f32 %v174, %v146
    %v176 = vadd.f32 %v175, 1e-05
    %v177 = vrsqrt.pop %v176
    %v179 = vrot.slane %v177, 1
    %v182 = vmul.f32 %v152, %v177
    %v183 = vmul.f32 %v153, %v177
    %v184 = vmul.f32 %v154, %v179
    %v185 = vmul.f32 %v155, %v179
    %v186 = vpack.c.bf16 %v182, %v182
    %v187 = vpack.c.bf16 %v183, %v183
    %v188 = vpack.c.bf16 %v184, %v184
    %v189 = vpack.c.bf16 %v185, %v185
    %v190 = vld [vmem:[#allocation5] sm:$0xff]
    %v191 = vld [vmem:[#allocation5 + $0x8] sm:$0xff]
    %v192 = vld [vmem:[#allocation5 + $0x10] sm:$0xff]
    %v193 = vld [vmem:[#allocation5 + $0x18] sm:$0xff]
    %v194 = vld [vmem:[#allocation5 + $0x20] sm:$0xff]
    %v195 = vld [vmem:[#allocation5 + $0x28] sm:$0xff]
    %v196 = vld [vmem:[#allocation5 + $0x30] sm:$0xff]
    %v197 = vld [vmem:[#allocation5 + $0x38] sm:$0xff]
    %v198 = vld [vmem:[#allocation5 + $0x40] sm:$0xff]
    %v199 = vld [vmem:[#allocation5 + $0x48] sm:$0xff]
    %v200 = vld [vmem:[#allocation5 + $0x50] sm:$0xff]
    %v201 = vld [vmem:[#allocation5 + $0x58] sm:$0xff]
    %v202 = vld [vmem:[#allocation5 + $0x60] sm:$0xff]
    %v203 = vld [vmem:[#allocation5 + $0x68] sm:$0xff]
    %v204 = vld [vmem:[#allocation5 + $0x70] sm:$0xff]
    %v205 = vld [vmem:[#allocation5 + $0x78] sm:$0xff]
    %v206 = vld [vmem:[#allocation5 + $0x80] sm:$0xff]
    %v207 = vld [vmem:[#allocation5 + $0x88] sm:$0xff]
    %v208 = vld [vmem:[#allocation5 + $0x90] sm:$0xff]
    %v209 = vld [vmem:[#allocation5 + $0x98] sm:$0xff]
    %v210 = vld [vmem:[#allocation5 + $0xa0] sm:$0xff]
    %v211 = vld [vmem:[#allocation5 + $0xa8] sm:$0xff]
    %v212 = vld [vmem:[#allocation5 + $0xb0] sm:$0xff]
    %v213 = vld [vmem:[#allocation5 + $0xb8] sm:$0xff]
    %v214 = vld [vmem:[#allocation5 + $0xc0] sm:$0xff]
    %v215 = vld [vmem:[#allocation5 + $0xc8] sm:$0xff]
    %v216 = vld [vmem:[#allocation5 + $0xd0] sm:$0xff]
    %v217 = vld [vmem:[#allocation5 + $0xd8] sm:$0xff]
    %v218 = vld [vmem:[#allocation5 + $0xe0] sm:$0xff]
    %v219 = vld [vmem:[#allocation5 + $0xe8] sm:$0xff]
    %v220 = vld [vmem:[#allocation5 + $0xf0] sm:$0xff]
    %v221 = vld [vmem:[#allocation5 + $0xf8] sm:$0xff]
    %v222 = vld [vmem:[#allocation5 + $0x100] sm:$0xff]
    %v223 = vld [vmem:[#allocation5 + $0x108] sm:$0xff]
    %v224 = vld [vmem:[#allocation5 + $0x110] sm:$0xff]
    %v225 = vld [vmem:[#allocation5 + $0x118] sm:$0xff]
    %v226 = vld [vmem:[#allocation5 + $0x120] sm:$0xff]
    %v227 = vld [vmem:[#allocation5 + $0x128] sm:$0xff]
    %v228 = vld [vmem:[#allocation5 + $0x130] sm:$0xff]
    %v229 = vld [vmem:[#allocation5 + $0x138] sm:$0xff]
    %v230 = vld [vmem:[#allocation5 + $0x140] sm:$0xff]
    %v231 = vld [vmem:[#allocation5 + $0x148] sm:$0xff]
    %v232 = vld [vmem:[#allocation5 + $0x150] sm:$0xff]
    %v233 = vld [vmem:[#allocation5 + $0x158] sm:$0xff]
    %v234 = vld [vmem:[#allocation5 + $0x160] sm:$0xff]
    %v235 = vld [vmem:[#allocation5 + $0x168] sm:$0xff]
    %v236 = vld [vmem:[#allocation5 + $0x170] sm:$0xff]
    %v237 = vld [vmem:[#allocation5 + $0x178] sm:$0xff]
    %v238 = vld [vmem:[#allocation5 + $0x180] sm:$0xff]
    %v239 = vld [vmem:[#allocation5 + $0x188] sm:$0xff]
    %v240 = vld [vmem:[#allocation5 + $0x190] sm:$0xff]
    %v241 = vld [vmem:[#allocation5 + $0x198] sm:$0xff]
    %v242 = vld [vmem:[#allocation5 + $0x1a0] sm:$0xff]
    %v243 = vld [vmem:[#allocation5 + $0x1a8] sm:$0xff]
    %v244 = vld [vmem:[#allocation5 + $0x1b0] sm:$0xff]
    %v245 = vld [vmem:[#allocation5 + $0x1b8] sm:$0xff]
    %v246 = vld [vmem:[#allocation5 + $0x1c0] sm:$0xff]
    %v247 = vld [vmem:[#allocation5 + $0x1c8] sm:$0xff]
    %v248 = vld [vmem:[#allocation5 + $0x1d0] sm:$0xff]
    %v249 = vld [vmem:[#allocation5 + $0x1d8] sm:$0xff]
    %v250 = vld [vmem:[#allocation5 + $0x1e0] sm:$0xff]
    %v251 = vld [vmem:[#allocation5 + $0x1e8] sm:$0xff]
    %v252 = vld [vmem:[#allocation5 + $0x1f0] sm:$0xff]
    %v253 = vld [vmem:[#allocation5 + $0x1f8] sm:$0xff]
    %v254 = vld [vmem:[#allocation5 + $0x200] sm:$0xff]
    %v255 = vld [vmem:[#allocation5 + $0x208] sm:$0xff]
    %v256 = vld [vmem:[#allocation5 + $0x210] sm:$0xff]
    %v257 = vld [vmem:[#allocation5 + $0x218] sm:$0xff]
    %v258 = vld [vmem:[#allocation5 + $0x220] sm:$0xff]
    %v259 = vld [vmem:[#allocation5 + $0x228] sm:$0xff]
    %v260 = vld [vmem:[#allocation5 + $0x230] sm:$0xff]
    %v261 = vld [vmem:[#allocation5 + $0x238] sm:$0xff]
    %v262 = vld [vmem:[#allocation5 + $0x240] sm:$0xff]
    %v263 = vld [vmem:[#allocation5 + $0x248] sm:$0xff]
    %v264 = vld [vmem:[#allocation5 + $0x250] sm:$0xff]
    %v265 = vld [vmem:[#allocation5 + $0x258] sm:$0xff]
    %v266 = vld [vmem:[#allocation5 + $0x260] sm:$0xff]
    %v267 = vld [vmem:[#allocation5 + $0x268] sm:$0xff]
    %v268 = vld [vmem:[#allocation5 + $0x270] sm:$0xff]
    %v269 = vld [vmem:[#allocation5 + $0x278] sm:$0xff]
    %v270 = vld [vmem:[#allocation5 + $0x280] sm:$0xff]
    %v271 = vld [vmem:[#allocation5 + $0x288] sm:$0xff]
    %v272 = vld [vmem:[#allocation5 + $0x290] sm:$0xff]
    %v273 = vld [vmem:[#allocation5 + $0x298] sm:$0xff]
    %v274 = vld [vmem:[#allocation5 + $0x2a0] sm:$0xff]
    %v275 = vld [vmem:[#allocation5 + $0x2a8] sm:$0xff]
    %v276 = vld [vmem:[#allocation5 + $0x2b0] sm:$0xff]
    %v277 = vld [vmem:[#allocation5 + $0x2b8] sm:$0xff]
    %v278 = vld [vmem:[#allocation5 + $0x2c0] sm:$0xff]
    %v279 = vld [vmem:[#allocation5 + $0x2c8] sm:$0xff]
    %v280 = vld [vmem:[#allocation5 + $0x2d0] sm:$0xff]
    %v281 = vld [vmem:[#allocation5 + $0x2d8] sm:$0xff]
    %v282 = vld [vmem:[#allocation5 + $0x2e0] sm:$0xff]
    %v283 = vld [vmem:[#allocation5 + $0x2e8] sm:$0xff]
    %v284 = vld [vmem:[#allocation5 + $0x2f0] sm:$0xff]
    %v285 = vld [vmem:[#allocation5 + $0x2f8] sm:$0xff]
    %v286 = vld [vmem:[#allocation5 + $0x300] sm:$0xff]
    %v287 = vld [vmem:[#allocation5 + $0x308] sm:$0xff]
    %v288 = vld [vmem:[#allocation5 + $0x310] sm:$0xff]
    %v289 = vld [vmem:[#allocation5 + $0x318] sm:$0xff]
    %v290 = vld [vmem:[#allocation5 + $0x320] sm:$0xff]
    %v291 = vld [vmem:[#allocation5 + $0x328] sm:$0xff]
    %v292 = vld [vmem:[#allocation5 + $0x330] sm:$0xff]
    %v293 = vld [vmem:[#allocation5 + $0x338] sm:$0xff]
    %v294 = vld [vmem:[#allocation5 + $0x340] sm:$0xff]
    %v295 = vld [vmem:[#allocation5 + $0x348] sm:$0xff]
    %v296 = vld [vmem:[#allocation5 + $0x350] sm:$0xff]
    %v297 = vld [vmem:[#allocation5 + $0x358] sm:$0xff]
    %v298 = vld [vmem:[#allocation5 + $0x360] sm:$0xff]
    %v299 = vld [vmem:[#allocation5 + $0x368] sm:$0xff]
    %v300 = vld [vmem:[#allocation5 + $0x370] sm:$0xff]
    %v301 = vld [vmem:[#allocation5 + $0x378] sm:$0xff]
    %v302 = vld [vmem:[#allocation5 + $0x380] sm:$0xff]
    %v303 = vld [vmem:[#allocation5 + $0x388] sm:$0xff]
    %v304 = vld [vmem:[#allocation5 + $0x390] sm:$0xff]
    %v305 = vld [vmem:[#allocation5 + $0x398] sm:$0xff]
    %v306 = vld [vmem:[#allocation5 + $0x3a0] sm:$0xff]
    %v307 = vld [vmem:[#allocation5 + $0x3a8] sm:$0xff]
    %v308 = vld [vmem:[#allocation5 + $0x3b0] sm:$0xff]
    %v309 = vld [vmem:[#allocation5 + $0x3b8] sm:$0xff]
    %v310 = vld [vmem:[#allocation5 + $0x3c0] sm:$0xff]
    %v311 = vld [vmem:[#allocation5 + $0x3c8] sm:$0xff]
    %v312 = vld [vmem:[#allocation5 + $0x3d0] sm:$0xff]
    %v313 = vld [vmem:[#allocation5 + $0x3d8] sm:$0xff]
    %v314 = vld [vmem:[#allocation5 + $0x3e0] sm:$0xff]
    %v315 = vld [vmem:[#allocation5 + $0x3e8] sm:$0xff]
    %v316 = vld [vmem:[#allocation5 + $0x3f0] sm:$0xff]
    %v317 = vld [vmem:[#allocation5 + $0x3f8] sm:$0xff]
    %v318 = vld [vmem:[#allocation7] sm:$0xff]
    %v320 = vlaneseq
    %v321 = vshrl.u32 %v320, 7
    %v322 = vsub.s32 0, %v321
    %v323 = vrot.slane %v318, %v322
    %v324 = vlaneseq
    %v325 = vshrl.u32 %v324, 7
    %v326 = vsub.s32 1, %v325
    %v327 = vrot.slane %v318, %v326
    %v328 = vlaneseq
    %v329 = vshrl.u32 %v328, 7
    %v330 = vsub.s32 2, %v329
    %v331 = vrot.slane %v318, %v330
    %v332 = vlaneseq
    %v333 = vshrl.u32 %v332, 7
    %v334 = vsub.s32 3, %v333
    %v335 = vrot.slane %v318, %v334
    %v336 = vlaneseq
    %v337 = vshrl.u32 %v336, 7
    %v338 = vsub.s32 4, %v337
    %v339 = vrot.slane %v318, %v338
    %v340 = vlaneseq
    %v341 = vshrl.u32 %v340, 7
    %v342 = vsub.s32 5, %v341
    %v343 = vrot.slane %v318, %v342
    %v344 = vlaneseq
    %v345 = vshrl.u32 %v344, 7
    %v346 = vsub.s32 6, %v345
    %v347 = vrot.slane %v318, %v346
    %v348 = vlaneseq
    %v349 = vshrl.u32 %v348, 7
    %v350 = vsub.s32 7, %v349
    %v351 = vrot.slane %v318, %v350
    %v364 = vunpack.c.l.b16 %v186
    %v365 = vunpack.c.l.b16 %v187
    %v366 = vunpack.c.l.b16 %v188
    %v367 = vunpack.c.l.b16 %v189
    %v368 = vrot.slane %v366, 7
    %v369 = vsel %vm136, %v368, %v364
    %v370 = vrot.slane %v367, 7
    %v371 = vsel %vm136, %v370, %v365
    %v372 = vpack.c.b16 %v369, %v369
    %v373 = vpack.c.b16 %v371, %v371
    %v504 = vunpack.c.l.b16 %v190
    %v505 = vunpack.c.h.b16 %v190
    %v506 = vunpack.c.l.b16 %v191
    %v507 = vunpack.c.h.b16 %v191
    %v508 = vunpack.c.l.b16 %v192
    %v509 = vunpack.c.h.b16 %v192
    %v510 = vunpack.c.l.b16 %v193
    %v511 = vunpack.c.h.b16 %v193
    %v512 = vunpack.c.l.b16 %v194
    %v513 = vunpack.c.h.b16 %v194
    %v514 = vunpack.c.l.b16 %v195
    %v515 = vunpack.c.h.b16 %v195
    %v516 = vunpack.c.l.b16 %v196
    %v517 = vunpack.c.h.b16 %v196
    %v518 = vunpack.c.l.b16 %v197
    %v519 = vunpack.c.h.b16 %v197
    %v520 = vunpack.c.l.b16 %v198
    %v521 = vunpack.c.h.b16 %v198
    %v522 = vunpack.c.l.b16 %v199
    %v523 = vunpack.c.h.b16 %v199
    %v524 = vunpack.c.l.b16 %v200
    %v525 = vunpack.c.h.b16 %v200
    %v526 = vunpack.c.l.b16 %v201
    %v527 = vunpack.c.h.b16 %v201
    %v528 = vunpack.c.l.b16 %v202
    %v529 = vunpack.c.h.b16 %v202
    %v530 = vunpack.c.l.b16 %v203
    %v531 = vunpack.c.h.b16 %v203
    %v532 = vunpack.c.l.b16 %v204
    %v533 = vunpack.c.h.b16 %v204
    %v534 = vunpack.c.l.b16 %v205
    %v535 = vunpack.c.h.b16 %v205
    %v536 = vunpack.c.l.b16 %v206
    %v537 = vunpack.c.h.b16 %v206
    %v538 = vunpack.c.l.b16 %v207
    %v539 = vunpack.c.h.b16 %v207
    %v540 = vunpack.c.l.b16 %v208
    %v541 = vunpack.c.h.b16 %v208
    %v542 = vunpack.c.l.b16 %v209
    %v543 = vunpack.c.h.b16 %v209
    %v544 = vunpack.c.l.b16 %v210
    %v545 = vunpack.c.h.b16 %v210
    %v546 = vunpack.c.l.b16 %v211
    %v547 = vunpack.c.h.b16 %v211
    %v548 = vunpack.c.l.b16 %v212
    %v549 = vunpack.c.h.b16 %v212
    %v550 = vunpack.c.l.b16 %v213
    %v551 = vunpack.c.h.b16 %v213
    %v552 = vunpack.c.l.b16 %v214
    %v553 = vunpack.c.h.b16 %v214
    %v554 = vunpack.c.l.b16 %v215
    %v555 = vunpack.c.h.b16 %v215
    %v556 = vunpack.c.l.b16 %v216
    %v557 = vunpack.c.h.b16 %v216
    %v558 = vunpack.c.l.b16 %v217
    %v559 = vunpack.c.h.b16 %v217
    %v560 = vunpack.c.l.b16 %v218
    %v561 = vunpack.c.h.b16 %v218
    %v562 = vunpack.c.l.b16 %v219
    %v563 = vunpack.c.h.b16 %v219
    %v564 = vunpack.c.l.b16 %v220
    %v565 = vunpack.c.h.b16 %v220
    %v566 = vunpack.c.l.b16 %v221
    %v567 = vunpack.c.h.b16 %v221
    %v568 = vunpack.c.l.b16 %v222
    %v569 = vunpack.c.h.b16 %v222
    %v570 = vunpack.c.l.b16 %v223
    %v571 = vunpack.c.h.b16 %v223
    %v572 = vunpack.c.l.b16 %v224
    %v573 = vunpack.c.h.b16 %v224
    %v574 = vunpack.c.l.b16 %v225
    %v575 = vunpack.c.h.b16 %v225
    %v576 = vunpack.c.l.b16 %v226
    %v577 = vunpack.c.h.b16 %v226
    %v578 = vunpack.c.l.b16 %v227
    %v579 = vunpack.c.h.b16 %v227
    %v580 = vunpack.c.l.b16 %v228
    %v581 = vunpack.c.h.b16 %v228
    %v582 = vunpack.c.l.b16 %v229
    %v583 = vunpack.c.h.b16 %v229
    %v584 = vunpack.c.l.b16 %v230
    %v585 = vunpack.c.h.b16 %v230
    %v586 = vunpack.c.l.b16 %v231
    %v587 = vunpack.c.h.b16 %v231
    %v588 = vunpack.c.l.b16 %v232
    %v589 = vunpack.c.h.b16 %v232
    %v590 = vunpack.c.l.b16 %v233
    %v591 = vunpack.c.h.b16 %v233
    %v592 = vunpack.c.l.b16 %v234
    %v593 = vunpack.c.h.b16 %v234
    %v594 = vunpack.c.l.b16 %v235
    %v595 = vunpack.c.h.b16 %v235
    %v596 = vunpack.c.l.b16 %v236
    %v597 = vunpack.c.h.b16 %v236
    %v598 = vunpack.c.l.b16 %v237
    %v599 = vunpack.c.h.b16 %v237
    %v600 = vunpack.c.l.b16 %v238
    %v601 = vunpack.c.h.b16 %v238
    %v602 = vunpack.c.l.b16 %v239
    %v603 = vunpack.c.h.b16 %v239
    %v604 = vunpack.c.l.b16 %v240
    %v605 = vunpack.c.h.b16 %v240
    %v606 = vunpack.c.l.b16 %v241
    %v607 = vunpack.c.h.b16 %v241
    %v608 = vunpack.c.l.b16 %v242
    %v609 = vunpack.c.h.b16 %v242
    %v610 = vunpack.c.l.b16 %v243
    %v611 = vunpack.c.h.b16 %v243
    %v612 = vunpack.c.l.b16 %v244
    %v613 = vunpack.c.h.b16 %v244
    %v614 = vunpack.c.l.b16 %v245
    %v615 = vunpack.c.h.b16 %v245
    %v616 = vunpack.c.l.b16 %v246
    %v617 = vunpack.c.h.b16 %v246
    %v618 = vunpack.c.l.b16 %v247
    %v619 = vunpack.c.h.b16 %v247
    %v620 = vunpack.c.l.b16 %v248
    %v621 = vunpack.c.h.b16 %v248
    %v622 = vunpack.c.l.b16 %v249
    %v623 = vunpack.c.h.b16 %v249
    %v624 = vunpack.c.l.b16 %v250
    %v625 = vunpack.c.h.b16 %v250
    %v626 = vunpack.c.l.b16 %v251
    %v627 = vunpack.c.h.b16 %v251
    %v628 = vunpack.c.l.b16 %v252
    %v629 = vunpack.c.h.b16 %v252
    %v630 = vunpack.c.l.b16 %v253
    %v631 = vunpack.c.h.b16 %v253
    %v632 = vunpack.c.l.b16 %v254
    %v633 = vunpack.c.h.b16 %v254
    %v634 = vunpack.c.l.b16 %v255
    %v635 = vunpack.c.h.b16 %v255
    %v636 = vunpack.c.l.b16 %v256
    %v637 = vunpack.c.h.b16 %v256
    %v638 = vunpack.c.l.b16 %v257
    %v639 = vunpack.c.h.b16 %v257
    %v640 = vunpack.c.l.b16 %v258
    %v641 = vunpack.c.h.b16 %v258
    %v642 = vunpack.c.l.b16 %v259
    %v643 = vunpack.c.h.b16 %v259
    %v644 = vunpack.c.l.b16 %v260
    %v645 = vunpack.c.h.b16 %v260
    %v646 = vunpack.c.l.b16 %v261
    %v647 = vunpack.c.h.b16 %v261
    %v648 = vunpack.c.l.b16 %v262
    %v649 = vunpack.c.h.b16 %v262
    %v650 = vunpack.c.l.b16 %v263
    %v651 = vunpack.c.h.b16 %v263
    %v652 = vunpack.c.l.b16 %v264
    %v653 = vunpack.c.h.b16 %v264
    %v654 = vunpack.c.l.b16 %v265
    %v655 = vunpack.c.h.b16 %v265
    %v656 = vunpack.c.l.b16 %v266
    %v657 = vunpack.c.h.b16 %v266
    %v658 = vunpack.c.l.b16 %v267
    %v659 = vunpack.c.h.b16 %v267
    %v660 = vunpack.c.l.b16 %v268
    %v661 = vunpack.c.h.b16 %v268
    %v662 = vunpack.c.l.b16 %v269
    %v663 = vunpack.c.h.b16 %v269
    %v664 = vunpack.c.l.b16 %v270
    %v665 = vunpack.c.h.b16 %v270
    %v666 = vunpack.c.l.b16 %v271
    %v667 = vunpack.c.h.b16 %v271
    %v668 = vunpack.c.l.b16 %v272
    %v669 = vunpack.c.h.b16 %v272
    %v670 = vunpack.c.l.b16 %v273
    %v671 = vunpack.c.h.b16 %v273
    %v672 = vunpack.c.l.b16 %v274
    %v673 = vunpack.c.h.b16 %v274
    %v674 = vunpack.c.l.b16 %v275
    %v675 = vunpack.c.h.b16 %v275
    %v676 = vunpack.c.l.b16 %v276
    %v677 = vunpack.c.h.b16 %v276
    %v678 = vunpack.c.l.b16 %v277
    %v679 = vunpack.c.h.b16 %v277
    %v680 = vunpack.c.l.b16 %v278
    %v681 = vunpack.c.h.b16 %v278
    %v682 = vunpack.c.l.b16 %v279
    %v683 = vunpack.c.h.b16 %v279
    %v684 = vunpack.c.l.b16 %v280
    %v685 = vunpack.c.h.b16 %v280
    %v686 = vunpack.c.l.b16 %v281
    %v687 = vunpack.c.h.b16 %v281
    %v688 = vunpack.c.l.b16 %v282
    %v689 = vunpack.c.h.b16 %v282
    %v690 = vunpack.c.l.b16 %v283
    %v691 = vunpack.c.h.b16 %v283
    %v692 = vunpack.c.l.b16 %v284
    %v693 = vunpack.c.h.b16 %v284
    %v694 = vunpack.c.l.b16 %v285
    %v695 = vunpack.c.h.b16 %v285
    %v696 = vunpack.c.l.b16 %v286
    %v697 = vunpack.c.h.b16 %v286
    %v698 = vunpack.c.l.b16 %v287
    %v699 = vunpack.c.h.b16 %v287
    %v700 = vunpack.c.l.b16 %v288
    %v701 = vunpack.c.h.b16 %v288
    %v702 = vunpack.c.l.b16 %v289
    %v703 = vunpack.c.h.b16 %v289
    %v704 = vunpack.c.l.b16 %v290
    %v705 = vunpack.c.h.b16 %v290
    %v706 = vunpack.c.l.b16 %v291
    %v707 = vunpack.c.h.b16 %v291
    %v708 = vunpack.c.l.b16 %v292
    %v709 = vunpack.c.h.b16 %v292
    %v710 = vunpack.c.l.b16 %v293
    %v711 = vunpack.c.h.b16 %v293
    %v712 = vunpack.c.l.b16 %v294
    %v713 = vunpack.c.h.b16 %v294
    %v714 = vunpack.c.l.b16 %v295
    %v715 = vunpack.c.h.b16 %v295
    %v716 = vunpack.c.l.b16 %v296
    %v717 = vunpack.c.h.b16 %v296
    %v718 = vunpack.c.l.b16 %v297
    %v719 = vunpack.c.h.b16 %v297
    %v720 = vunpack.c.l.b16 %v298
    %v721 = vunpack.c.h.b16 %v298
    %v722 = vunpack.c.l.b16 %v299
    %v723 = vunpack.c.h.b16 %v299
    %v724 = vunpack.c.l.b16 %v300
    %v725 = vunpack.c.h.b16 %v300
    %v726 = vunpack.c.l.b16 %v301
    %v727 = vunpack.c.h.b16 %v301
    %v728 = vunpack.c.l.b16 %v302
    %v729 = vunpack.c.h.b16 %v302
    %v730 = vunpack.c.l.b16 %v303
    %v731 = vunpack.c.h.b16 %v303
    %v732 = vunpack.c.l.b16 %v304
    %v733 = vunpack.c.h.b16 %v304
    %v734 = vunpack.c.l.b16 %v305
    %v735 = vunpack.c.h.b16 %v305
    %v736 = vunpack.c.l.b16 %v306
    %v737 = vunpack.c.h.b16 %v306
    %v738 = vunpack.c.l.b16 %v307
    %v739 = vunpack.c.h.b16 %v307
    %v740 = vunpack.c.l.b16 %v308
    %v741 = vunpack.c.h.b16 %v308
    %v742 = vunpack.c.l.b16 %v309
    %v743 = vunpack.c.h.b16 %v309
    %v744 = vunpack.c.l.b16 %v310
    %v745 = vunpack.c.h.b16 %v310
    %v746 = vunpack.c.l.b16 %v311
    %v747 = vunpack.c.h.b16 %v311
    %v748 = vunpack.c.l.b16 %v312
    %v749 = vunpack.c.h.b16 %v312
    %v750 = vunpack.c.l.b16 %v313
    %v751 = vunpack.c.h.b16 %v313
    %v752 = vunpack.c.l.b16 %v314
    %v753 = vunpack.c.h.b16 %v314
    %v754 = vunpack.c.l.b16 %v315
    %v755 = vunpack.c.h.b16 %v315
    %v756 = vunpack.c.l.b16 %v316
    %v757 = vunpack.c.h.b16 %v316
    %v758 = vunpack.c.l.b16 %v317
    %v759 = vunpack.c.h.b16 %v317
    %v760 = vpack.c.b16 %v512, %v504
    %v761 = vpack.c.b16 %v513, %v505
    %v762 = vpack.c.b16 %v514, %v506
    %v763 = vpack.c.b16 %v515, %v507
    %v764 = vpack.c.b16 %v516, %v508
    %v765 = vpack.c.b16 %v517, %v509
    %v766 = vpack.c.b16 %v518, %v510
    %v767 = vpack.c.b16 %v519, %v511
    %v768 = vpack.c.b16 %v528, %v520
    %v769 = vpack.c.b16 %v529, %v521
    %v770 = vpack.c.b16 %v530, %v522
    %v771 = vpack.c.b16 %v531, %v523
    %v772 = vpack.c.b16 %v532, %v524
    %v773 = vpack.c.b16 %v533, %v525
    %v774 = vpack.c.b16 %v534, %v526
    %v775 = vpack.c.b16 %v535, %v527
    %v776 = vpack.c.b16 %v544, %v536
    %v777 = vpack.c.b16 %v545, %v537
    %v778 = vpack.c.b16 %v546, %v538
    %v779 = vpack.c.b16 %v547, %v539
    %v780 = vpack.c.b16 %v548, %v540
    %v781 = vpack.c.b16 %v549, %v541
    %v782 = vpack.c.b16 %v550, %v542
    %v783 = vpack.c.b16 %v551, %v543
    %v784 = vpack.c.b16 %v560, %v552
    %v785 = vpack.c.b16 %v561, %v553
    %v786 = vpack.c.b16 %v562, %v554
    %v787 = vpack.c.b16 %v563, %v555
    %v788 = vpack.c.b16 %v564, %v556
    %v789 = vpack.c.b16 %v565, %v557
    %v790 = vpack.c.b16 %v566, %v558
    %v791 = vpack.c.b16 %v567, %v559
    %v792 = vpack.c.b16 %v576, %v568
    %v793 = vpack.c.b16 %v577, %v569
    %v794 = vpack.c.b16 %v578, %v570
    %v795 = vpack.c.b16 %v579, %v571
    %v796 = vpack.c.b16 %v580, %v572
    %v797 = vpack.c.b16 %v581, %v573
    %v798 = vpack.c.b16 %v582, %v574
    %v799 = vpack.c.b16 %v583, %v575
    %v800 = vpack.c.b16 %v592, %v584
    %v801 = vpack.c.b16 %v593, %v585
    %v802 = vpack.c.b16 %v594, %v586
    %v803 = vpack.c.b16 %v595, %v587
    %v804 = vpack.c.b16 %v596, %v588
    %v805 = vpack.c.b16 %v597, %v589
    %v806 = vpack.c.b16 %v598, %v590
    %v807 = vpack.c.b16 %v599, %v591
    %v808 = vpack.c.b16 %v608, %v600
    %v809 = vpack.c.b16 %v609, %v601
    %v810 = vpack.c.b16 %v610, %v602
    %v811 = vpack.c.b16 %v611, %v603
    %v812 = vpack.c.b16 %v612, %v604
    %v813 = vpack.c.b16 %v613, %v605
    %v814 = vpack.c.b16 %v614, %v606
    %v815 = vpack.c.b16 %v615, %v607
    %v816 = vpack.c.b16 %v624, %v616
    %v817 = vpack.c.b16 %v625, %v617
    %v818 = vpack.c.b16 %v626, %v618
    %v819 = vpack.c.b16 %v627, %v619
    %v820 = vpack.c.b16 %v628, %v620
    %v821 = vpack.c.b16 %v629, %v621
    %v822 = vpack.c.b16 %v630, %v622
    %v823 = vpack.c.b16 %v631, %v623
    %v824 = vpack.c.b16 %v640, %v632
    %v825 = vpack.c.b16 %v641, %v633
    %v826 = vpack.c.b16 %v642, %v634
    %v827 = vpack.c.b16 %v643, %v635
    %v828 = vpack.c.b16 %v644, %v636
    %v829 = vpack.c.b16 %v645, %v637
    %v830 = vpack.c.b16 %v646, %v638
    %v831 = vpack.c.b16 %v647, %v639
    %v832 = vpack.c.b16 %v656, %v648
    %v833 = vpack.c.b16 %v657, %v649
    %v834 = vpack.c.b16 %v658, %v650
    %v835 = vpack.c.b16 %v659, %v651
    %v836 = vpack.c.b16 %v660, %v652
    %v837 = vpack.c.b16 %v661, %v653
    %v838 = vpack.c.b16 %v662, %v654
    %v839 = vpack.c.b16 %v663, %v655
    %v840 = vpack.c.b16 %v672, %v664
    %v841 = vpack.c.b16 %v673, %v665
    %v842 = vpack.c.b16 %v674, %v666
    %v843 = vpack.c.b16 %v675, %v667
    %v844 = vpack.c.b16 %v676, %v668
    %v845 = vpack.c.b16 %v677, %v669
    %v846 = vpack.c.b16 %v678, %v670
    %v847 = vpack.c.b16 %v679, %v671
    %v848 = vpack.c.b16 %v688, %v680
    %v849 = vpack.c.b16 %v689, %v681
    %v850 = vpack.c.b16 %v690, %v682
    %v851 = vpack.c.b16 %v691, %v683
    %v852 = vpack.c.b16 %v692, %v684
    %v853 = vpack.c.b16 %v693, %v685
    %v854 = vpack.c.b16 %v694, %v686
    %v855 = vpack.c.b16 %v695, %v687
    %v856 = vpack.c.b16 %v704, %v696
    %v857 = vpack.c.b16 %v705, %v697
    %v858 = vpack.c.b16 %v706, %v698
    %v859 = vpack.c.b16 %v707, %v699
    %v860 = vpack.c.b16 %v708, %v700
    %v861 = vpack.c.b16 %v709, %v701
    %v862 = vpack.c.b16 %v710, %v702
    %v863 = vpack.c.b16 %v711, %v703
    %v864 = vpack.c.b16 %v720, %v712
    %v865 = vpack.c.b16 %v721, %v713
    %v866 = vpack.c.b16 %v722, %v714
    %v867 = vpack.c.b16 %v723, %v715
    %v868 = vpack.c.b16 %v724, %v716
    %v869 = vpack.c.b16 %v725, %v717
    %v870 = vpack.c.b16 %v726, %v718
    %v871 = vpack.c.b16 %v727, %v719
    %v872 = vpack.c.b16 %v736, %v728
    %v873 = vpack.c.b16 %v737, %v729
    %v874 = vpack.c.b16 %v738, %v730
    %v875 = vpack.c.b16 %v739, %v731
    %v876 = vpack.c.b16 %v740, %v732
    %v877 = vpack.c.b16 %v741, %v733
    %v878 = vpack.c.b16 %v742, %v734
    %v879 = vpack.c.b16 %v743, %v735
    %v880 = vpack.c.b16 %v752, %v744
    %v881 = vpack.c.b16 %v753, %v745
    %v882 = vpack.c.b16 %v754, %v746
    %v883 = vpack.c.b16 %v755, %v747
    %v884 = vpack.c.b16 %v756, %v748
    %v885 = vpack.c.b16 %v757, %v749
    %v886 = vpack.c.b16 %v758, %v750
    %v887 = vpack.c.b16 %v759, %v751
    %1016 = vmatprep.subr.bf16.mxu0 %v817
    %1017 = vmatpush1.bf16.msra.mxu0 %v816
    %1018 = vmatprep.subr.bf16.mxu0 %v809
    %1019 = vmatpush1.bf16.msra.mxu0 %v808
    %1020 = vmatprep.subr.bf16.mxu0 %v801
    %1021 = vmatpush1.bf16.msra.mxu0 %v800
    %1022 = vmatprep.subr.bf16.mxu0 %v793
    %1023 = vmatpush1.bf16.msra.mxu0 %v792
    %1024 = vmatprep.subr.bf16.mxu0 %v785
    %1025 = vmatpush1.bf16.msra.mxu0 %v784
    %1026 = vmatprep.subr.bf16.mxu0 %v777
    %1027 = vmatpush1.bf16.msra.mxu0 %v776
    %1028 = vmatprep.subr.bf16.mxu0 %v769
    %1029 = vmatpush1.bf16.msra.mxu0 %v768
    %1030 = vmatprep.subr.bf16.mxu0 %v761
    %1031 = vmatpush1.bf16.msra.mxu0 %v760
    %1032 = vmatprep.subr.bf16.mxu0 %v881
    %1033 = vmatpush2.bf16.msra.mxu0 %v880
    %1034 = vmatprep.subr.bf16.mxu0 %v873
    %1035 = vmatpush2.bf16.msra.mxu0 %v872
    %1036 = vmatprep.subr.bf16.mxu0 %v865
    %1037 = vmatpush2.bf16.msra.mxu0 %v864
    %1038 = vmatprep.subr.bf16.mxu0 %v857
    %1039 = vmatpush2.bf16.msra.mxu0 %v856
    %1040 = vmatprep.subr.bf16.mxu0 %v849
    %1041 = vmatpush2.bf16.msra.mxu0 %v848
    %1042 = vmatprep.subr.bf16.mxu0 %v841
    %1043 = vmatpush2.bf16.msra.mxu0 %v840
    %1044 = vmatprep.subr.bf16.mxu0 %v833
    %1045 = vmatpush2.bf16.msra.mxu0 %v832
    %1046 = vmatprep.subr.bf16.mxu0 %v825
    %1047 = vmatpush2.bf16.msra.mxu0 %v824
    %1048 = vmatprep.mubr.bf16.mxu0 %v373
    %1049 = vmatmul.mubr.bf16.gmra.mxu0 %v372
    %v1050 = vpop.f32.mrf.mxu0
    %v1051 = vadd.f32 %v323, %v1050
    %v1052 = vpop.f32.mrf.mxu0
    %v1053 = vadd.f32 %v327, %v1052
    %v1054 = vpop.f32.mrf.mxu0
    %v1055 = vpop.f32.mrf.mxu0
    %1056 = vdwg.mxu0
    %1057 = vmatprep.subr.bf16.mxu0 %v819
    %1058 = vmatpush1.bf16.msra.mxu0 %v818
    %1059 = vmatprep.subr.bf16.mxu0 %v811
    %1060 = vmatpush1.bf16.msra.mxu0 %v810
    %1061 = vmatprep.subr.bf16.mxu0 %v803
    %1062 = vmatpush1.bf16.msra.mxu0 %v802
    %1063 = vmatprep.subr.bf16.mxu0 %v795
    %1064 = vmatpush1.bf16.msra.mxu0 %v794
    %1065 = vmatprep.subr.bf16.mxu0 %v787
    %1066 = vmatpush1.bf16.msra.mxu0 %v786
    %1067 = vmatprep.subr.bf16.mxu0 %v779
    %1068 = vmatpush1.bf16.msra.mxu0 %v778
    %1069 = vmatprep.subr.bf16.mxu0 %v771
    %1070 = vmatpush1.bf16.msra.mxu0 %v770
    %1071 = vmatprep.subr.bf16.mxu0 %v763
    %1072 = vmatpush1.bf16.msra.mxu0 %v762
    %1073 = vmatprep.subr.bf16.mxu0 %v883
    %1074 = vmatpush2.bf16.msra.mxu0 %v882
    %1075 = vmatprep.subr.bf16.mxu0 %v875
    %1076 = vmatpush2.bf16.msra.mxu0 %v874
    %1077 = vmatprep.subr.bf16.mxu0 %v867
    %1078 = vmatpush2.bf16.msra.mxu0 %v866
    %1079 = vmatprep.subr.bf16.mxu0 %v859
    %1080 = vmatpush2.bf16.msra.mxu0 %v858
    %1081 = vmatprep.subr.bf16.mxu0 %v851
    %1082 = vmatpush2.bf16.msra.mxu0 %v850
    %1083 = vmatprep.subr.bf16.mxu0 %v843
    %1084 = vmatpush2.bf16.msra.mxu0 %v842
    %1085 = vmatprep.subr.bf16.mxu0 %v835
    %1086 = vmatpush2.bf16.msra.mxu0 %v834
    %1087 = vmatprep.subr.bf16.mxu0 %v827
    %1088 = vmatpush2.bf16.msra.mxu0 %v826
    %1089 = vmatprep.mubr.bf16.mxu0 %v373
    %1090 = vmatmul.mubr.bf16.gmra.mxu0 %v372
    %v1091 = vpop.f32.mrf.mxu0
    %v1092 = vadd.f32 %v331, %v1091
    %v1093 = vpop.f32.mrf.mxu0
    %v1094 = vadd.f32 %v335, %v1093
    %v1095 = vpop.f32.mrf.mxu0
    %v1096 = vpop.f32.mrf.mxu0
    %1097 = vdwg.mxu0
    %1098 = vmatprep.subr.bf16.mxu0 %v821
    %1099 = vmatpush1.bf16.msra.mxu0 %v820
    %1100 = vmatprep.subr.bf16.mxu0 %v813
    %1101 = vmatpush1.bf16.msra.mxu0 %v812
    %1102 = vmatprep.subr.bf16.mxu0 %v805
    %1103 = vmatpush1.bf16.msra.mxu0 %v804
    %1104 = vmatprep.subr.bf16.mxu0 %v797
    %1105 = vmatpush1.bf16.msra.mxu0 %v796
    %1106 = vmatprep.subr.bf16.mxu0 %v789
    %1107 = vmatpush1.bf16.msra.mxu0 %v788
    %1108 = vmatprep.subr.bf16.mxu0 %v781
    %1109 = vmatpush1.bf16.msra.mxu0 %v780
    %1110 = vmatprep.subr.bf16.mxu0 %v773
    %1111 = vmatpush1.bf16.msra.mxu0 %v772
    %1112 = vmatprep.subr.bf16.mxu0 %v765
    %1113 = vmatpush1.bf16.msra.mxu0 %v764
    %1114 = vmatprep.subr.bf16.mxu0 %v885
    %1115 = vmatpush2.bf16.msra.mxu0 %v884
    %1116 = vmatprep.subr.bf16.mxu0 %v877
    %1117 = vmatpush2.bf16.msra.mxu0 %v876
    %1118 = vmatprep.subr.bf16.mxu0 %v869
    %1119 = vmatpush2.bf16.msra.mxu0 %v868
    %1120 = vmatprep.subr.bf16.mxu0 %v861
    %1121 = vmatpush2.bf16.msra.mxu0 %v860
    %1122 = vmatprep.subr.bf16.mxu0 %v853
    %1123 = vmatpush2.bf16.msra.mxu0 %v852
    %1124 = vmatprep.subr.bf16.mxu0 %v845
    %1125 = vmatpush2.bf16.msra.mxu0 %v844
    %1126 = vmatprep.subr.bf16.mxu0 %v837
    %1127 = vmatpush2.bf16.msra.mxu0 %v836
    %1128 = vmatprep.subr.bf16.mxu0 %v829
    %1129 = vmatpush2.bf16.msra.mxu0 %v828
    %1130 = vmatprep.mubr.bf16.mxu0 %v373
    %1131 = vmatmul.mubr.bf16.gmra.mxu0 %v372
    %v1132 = vpop.f32.mrf.mxu0
    %v1133 = vadd.f32 %v339, %v1132
    %v1134 = vpop.f32.mrf.mxu0
    %v1135 = vadd.f32 %v343, %v1134
    %v1136 = vpop.f32.mrf.mxu0
    %v1137 = vpop.f32.mrf.mxu0
    %1138 = vdwg.mxu0
    %1139 = vmatprep.subr.bf16.mxu0 %v823
    %1140 = vmatpush1.bf16.msra.mxu0 %v822
    %1141 = vmatprep.subr.bf16.mxu0 %v815
    %1142 = vmatpush1.bf16.msra.mxu0 %v814
    %1143 = vmatprep.subr.bf16.mxu0 %v807
    %1144 = vmatpush1.bf16.msra.mxu0 %v806
    %1145 = vmatprep.subr.bf16.mxu0 %v799
    %1146 = vmatpush1.bf16.msra.mxu0 %v798
    %1147 = vmatprep.subr.bf16.mxu0 %v791
    %1148 = vmatpush1.bf16.msra.mxu0 %v790
    %1149 = vmatprep.subr.bf16.mxu0 %v783
    %1150 = vmatpush1.bf16.msra.mxu0 %v782
    %1151 = vmatprep.subr.bf16.mxu0 %v775
    %1152 = vmatpush1.bf16.msra.mxu0 %v774
    %1153 = vmatprep.subr.bf16.mxu0 %v767
    %1154 = vmatpush1.bf16.msra.mxu0 %v766
    %1155 = vmatprep.subr.bf16.mxu0 %v887
    %1156 = vmatpush2.bf16.msra.mxu0 %v886
    %1157 = vmatprep.subr.bf16.mxu0 %v879
    %1158 = vmatpush2.bf16.msra.mxu0 %v878
    %1159 = vmatprep.subr.bf16.mxu0 %v871
    %1160 = vmatpush2.bf16.msra.mxu0 %v870
    %1161 = vmatprep.subr.bf16.mxu0 %v863
    %1162 = vmatpush2.bf16.msra.mxu0 %v862
    %1163 = vmatprep.subr.bf16.mxu0 %v855
    %1164 = vmatpush2.bf16.msra.mxu0 %v854
    %1165 = vmatprep.subr.bf16.mxu0 %v847
    %1166 = vmatpush2.bf16.msra.mxu0 %v846
    %1167 = vmatprep.subr.bf16.mxu0 %v839
    %1168 = vmatpush2.bf16.msra.mxu0 %v838
    %1169 = vmatprep.subr.bf16.mxu0 %v831
    %1170 = vmatpush2.bf16.msra.mxu0 %v830
    %1171 = vmatprep.mubr.bf16.mxu0 %v373
    %1172 = vmatmul.mubr.bf16.gmra.mxu0 %v372
    %v1173 = vpop.f32.mrf.mxu0
    %v1174 = vadd.f32 %v347, %v1173
    %v1175 = vpop.f32.mrf.mxu0
    %v1176 = vadd.f32 %v351, %v1175
    %v1177 = vpop.f32.mrf.mxu0
    %v1178 = vpop.f32.mrf.mxu0
    %1179 = vdwg.mxu0
    %v1180 = vmul.f32 %v1051, %v1051
    %v1181 = vmul.f32 %v1053, %v1053
    %v1182 = vmul.f32 %v1092, %v1092
    %v1183 = vmul.f32 %v1094, %v1094
    %v1184 = vmul.f32 %v1133, %v1133
    %v1185 = vmul.f32 %v1135, %v1135
    %v1186 = vmul.f32 %v1174, %v1174
    %v1187 = vmul.f32 %v1176, %v1176
    %v1188 = vmul.f32 %v1051, %v1180
    %v1189 = vmul.f32 %v1053, %v1181
    %v1190 = vmul.f32 %v1092, %v1182
    %v1191 = vmul.f32 %v1094, %v1183
    %v1192 = vmul.f32 %v1133, %v1184
    %v1193 = vmul.f32 %v1135, %v1185
    %v1194 = vmul.f32 %v1174, %v1186
    %v1195 = vmul.f32 %v1176, %v1187
    %v1196 = vmul.f32 %v1188, 0.044715
    %v1197 = vmul.f32 %v1189, 0.044715
    %v1198 = vmul.f32 %v1190, 0.044715
    %v1199 = vmul.f32 %v1191, 0.044715
    %v1200 = vmul.f32 %v1192, 0.044715
    %v1201 = vmul.f32 %v1193, 0.044715
    %v1202 = vmul.f32 %v1194, 0.044715
    %v1203 = vmul.f32 %v1195, 0.044715
    %v1204 = vadd.f32 %v1051, %v1196
    %v1205 = vadd.f32 %v1053, %v1197
    %v1206 = vadd.f32 %v1092, %v1198
    %v1207 = vadd.f32 %v1094, %v1199
    %v1208 = vadd.f32 %v1133, %v1200
    %v1209 = vadd.f32 %v1135, %v1201
    %v1210 = vadd.f32 %v1174, %v1202
    %v1211 = vadd.f32 %v1176, %v1203
    %v1212 = vmul.f32 %v1204, 0.7978846
    %v1213 = vmul.f32 %v1205, 0.7978846
    %v1214 = vmul.f32 %v1206, 0.7978846
    %v1215 = vmul.f32 %v1207, 0.7978846
    %v1216 = vmul.f32 %v1208, 0.7978846
    %v1217 = vmul.f32 %v1209, 0.7978846
    %v1218 = vmul.f32 %v1210, 0.7978846
    %v1219 = vmul.f32 %v1211, 0.7978846
    %v1220 = vtanh.pop %v1212
    %v1221 = vtanh.pop %v1213
    %v1222 = vtanh.pop %v1214
    %v1223 = vtanh.pop %v1215
    %v1224 = vtanh.pop %v1216
    %v1225 = vtanh.pop %v1217
    %v1226 = vtanh.pop %v1218
    %v1227 = vtanh.pop %v1219
    %v1228 = vadd.f32 %v1220, 1.0
    %v1229 = vadd.f32 %v1221, 1.0
    %v1230 = vadd.f32 %v1222, 1.0
    %v1231 = vadd.f32 %v1223, 1.0
    %v1232 = vadd.f32 %v1224, 1.0
    %v1233 = vadd.f32 %v1225, 1.0
    %v1234 = vadd.f32 %v1226, 1.0
    %v1235 = vadd.f32 %v1227, 1.0
    %v1236 = vmul.f32 %v1228, 0.5
    %v1237 = vmul.f32 %v1229, 0.5
    %v1238 = vmul.f32 %v1230, 0.5
    %v1239 = vmul.f32 %v1231, 0.5
    %v1240 = vmul.f32 %v1232, 0.5
    %v1241 = vmul.f32 %v1233, 0.5
    %v1242 = vmul.f32 %v1234, 0.5
    %v1243 = vmul.f32 %v1235, 0.5
    %v1244 = vmul.f32 %v1051, %v1236
    %v1245 = vmul.f32 %v1053, %v1237
    %v1246 = vmul.f32 %v1092, %v1238
    %v1247 = vmul.f32 %v1094, %v1239
    %v1248 = vmul.f32 %v1133, %v1240
    %v1249 = vmul.f32 %v1135, %v1241
    %v1250 = vmul.f32 %v1174, %v1242
    %v1251 = vmul.f32 %v1176, %v1243
    %v1252 = vpack.c.bf16 %v1244, %v1244
    %v1253 = vpack.c.bf16 %v1245, %v1245
    %v1254 = vpack.c.bf16 %v1246, %v1246
    %v1255 = vpack.c.bf16 %v1247, %v1247
    %v1256 = vpack.c.bf16 %v1248, %v1248
    %v1257 = vpack.c.bf16 %v1249, %v1249
    %v1258 = vpack.c.bf16 %v1250, %v1250
    %v1259 = vpack.c.bf16 %v1251, %v1251
    %v1260 = vld [vmem:[#allocation8] sm:$0xff]
    %v1261 = vld [vmem:[#allocation8 + $0x8] sm:$0xff]
    %v1262 = vld [vmem:[#allocation8 + $0x10] sm:$0xff]
    %v1263 = vld [vmem:[#allocation8 + $0x18] sm:$0xff]
    %v1264 = vld [vmem:[#allocation8 + $0x20] sm:$0xff]
    %v1265 = vld [vmem:[#allocation8 + $0x28] sm:$0xff]
    %v1266 = vld [vmem:[#allocation8 + $0x30] sm:$0xff]
    %v1267 = vld [vmem:[#allocation8 + $0x38] sm:$0xff]
    %v1268 = vld [vmem:[#allocation8 + $0x40] sm:$0xff]
    %v1269 = vld [vmem:[#allocation8 + $0x48] sm:$0xff]
    %v1270 = vld [vmem:[#allocation8 + $0x50] sm:$0xff]
    %v1271 = vld [vmem:[#allocation8 + $0x58] sm:$0xff]
    %v1272 = vld [vmem:[#allocation8 + $0x60] sm:$0xff]
    %v1273 = vld [vmem:[#allocation8 + $0x68] sm:$0xff]
    %v1274 = vld [vmem:[#allocation8 + $0x70] sm:$0xff]
    %v1275 = vld [vmem:[#allocation8 + $0x78] sm:$0xff]
    %v1276 = vld [vmem:[#allocation8 + $0x80] sm:$0xff]
    %v1277 = vld [vmem:[#allocation8 + $0x88] sm:$0xff]
    %v1278 = vld [vmem:[#allocation8 + $0x90] sm:$0xff]
    %v1279 = vld [vmem:[#allocation8 + $0x98] sm:$0xff]
    %v1280 = vld [vmem:[#allocation8 + $0xa0] sm:$0xff]
    %v1281 = vld [vmem:[#allocation8 + $0xa8] sm:$0xff]
    %v1282 = vld [vmem:[#allocation8 + $0xb0] sm:$0xff]
    %v1283 = vld [vmem:[#allocation8 + $0xb8] sm:$0xff]
    %v1284 = vld [vmem:[#allocation8 + $0xc0] sm:$0xff]
    %v1285 = vld [vmem:[#allocation8 + $0xc8] sm:$0xff]
    %v1286 = vld [vmem:[#allocation8 + $0xd0] sm:$0xff]
    %v1287 = vld [vmem:[#allocation8 + $0xd8] sm:$0xff]
    %v1288 = vld [vmem:[#allocation8 + $0xe0] sm:$0xff]
    %v1289 = vld [vmem:[#allocation8 + $0xe8] sm:$0xff]
    %v1290 = vld [vmem:[#allocation8 + $0xf0] sm:$0xff]
    %v1291 = vld [vmem:[#allocation8 + $0xf8] sm:$0xff]
    %v1292 = vld [vmem:[#allocation8 + $0x100] sm:$0xff]
    %v1293 = vld [vmem:[#allocation8 + $0x108] sm:$0xff]
    %v1294 = vld [vmem:[#allocation8 + $0x110] sm:$0xff]
    %v1295 = vld [vmem:[#allocation8 + $0x118] sm:$0xff]
    %v1296 = vld [vmem:[#allocation8 + $0x120] sm:$0xff]
    %v1297 = vld [vmem:[#allocation8 + $0x128] sm:$0xff]
    %v1298 = vld [vmem:[#allocation8 + $0x130] sm:$0xff]
    %v1299 = vld [vmem:[#allocation8 + $0x138] sm:$0xff]
    %v1300 = vld [vmem:[#allocation8 + $0x140] sm:$0xff]
    %v1301 = vld [vmem:[#allocation8 + $0x148] sm:$0xff]
    %v1302 = vld [vmem:[#allocation8 + $0x150] sm:$0xff]
    %v1303 = vld [vmem:[#allocation8 + $0x158] sm:$0xff]
    %v1304 = vld [vmem:[#allocation8 + $0x160] sm:$0xff]
    %v1305 = vld [vmem:[#allocation8 + $0x168] sm:$0xff]
    %v1306 = vld [vmem:[#allocation8 + $0x170] sm:$0xff]
    %v1307 = vld [vmem:[#allocation8 + $0x178] sm:$0xff]
    %v1308 = vld [vmem:[#allocation8 + $0x180] sm:$0xff]
    %v1309 = vld [vmem:[#allocation8 + $0x188] sm:$0xff]
    %v1310 = vld [vmem:[#allocation8 + $0x190] sm:$0xff]
    %v1311 = vld [vmem:[#allocation8 + $0x198] sm:$0xff]
    %v1312 = vld [vmem:[#allocation8 + $0x1a0] sm:$0xff]
    %v1313 = vld [vmem:[#allocation8 + $0x1a8] sm:$0xff]
    %v1314 = vld [vmem:[#allocation8 + $0x1b0] sm:$0xff]
    %v1315 = vld [vmem:[#allocation8 + $0x1b8] sm:$0xff]
    %v1316 = vld [vmem:[#allocation8 + $0x1c0] sm:$0xff]
    %v1317 = vld [vmem:[#allocation8 + $0x1c8] sm:$0xff]
    %v1318 = vld [vmem:[#allocation8 + $0x1d0] sm:$0xff]
    %v1319 = vld [vmem:[#allocation8 + $0x1d8] sm:$0xff]
    %v1320 = vld [vmem:[#allocation8 + $0x1e0] sm:$0xff]
    %v1321 = vld [vmem:[#allocation8 + $0x1e8] sm:$0xff]
    %v1322 = vld [vmem:[#allocation8 + $0x1f0] sm:$0xff]
    %v1323 = vld [vmem:[#allocation8 + $0x1f8] sm:$0xff]
    %v1324 = vld [vmem:[#allocation8 + $0x200] sm:$0xff]
    %v1325 = vld [vmem:[#allocation8 + $0x208] sm:$0xff]
    %v1326 = vld [vmem:[#allocation8 + $0x210] sm:$0xff]
    %v1327 = vld [vmem:[#allocation8 + $0x218] sm:$0xff]
    %v1328 = vld [vmem:[#allocation8 + $0x220] sm:$0xff]
    %v1329 = vld [vmem:[#allocation8 + $0x228] sm:$0xff]
    %v1330 = vld [vmem:[#allocation8 + $0x230] sm:$0xff]
    %v1331 = vld [vmem:[#allocation8 + $0x238] sm:$0xff]
    %v1332 = vld [vmem:[#allocation8 + $0x240] sm:$0xff]
    %v1333 = vld [vmem:[#allocation8 + $0x248] sm:$0xff]
    %v1334 = vld [vmem:[#allocation8 + $0x250] sm:$0xff]
    %v1335 = vld [vmem:[#allocation8 + $0x258] sm:$0xff]
    %v1336 = vld [vmem:[#allocation8 + $0x260] sm:$0xff]
    %v1337 = vld [vmem:[#allocation8 + $0x268] sm:$0xff]
    %v1338 = vld [vmem:[#allocation8 + $0x270] sm:$0xff]
    %v1339 = vld [vmem:[#allocation8 + $0x278] sm:$0xff]
    %v1340 = vld [vmem:[#allocation8 + $0x280] sm:$0xff]
    %v1341 = vld [vmem:[#allocation8 + $0x288] sm:$0xff]
    %v1342 = vld [vmem:[#allocation8 + $0x290] sm:$0xff]
    %v1343 = vld [vmem:[#allocation8 + $0x298] sm:$0xff]
    %v1344 = vld [vmem:[#allocation8 + $0x2a0] sm:$0xff]
    %v1345 = vld [vmem:[#allocation8 + $0x2a8] sm:$0xff]
    %v1346 = vld [vmem:[#allocation8 + $0x2b0] sm:$0xff]
    %v1347 = vld [vmem:[#allocation8 + $0x2b8] sm:$0xff]
    %v1348 = vld [vmem:[#allocation8 + $0x2c0] sm:$0xff]
    %v1349 = vld [vmem:[#allocation8 + $0x2c8] sm:$0xff]
    %v1350 = vld [vmem:[#allocation8 + $0x2d0] sm:$0xff]
    %v1351 = vld [vmem:[#allocation8 + $0x2d8] sm:$0xff]
    %v1352 = vld [vmem:[#allocation8 + $0x2e0] sm:$0xff]
    %v1353 = vld [vmem:[#allocation8 + $0x2e8] sm:$0xff]
    %v1354 = vld [vmem:[#allocation8 + $0x2f0] sm:$0xff]
    %v1355 = vld [vmem:[#allocation8 + $0x2f8] sm:$0xff]
    %v1356 = vld [vmem:[#allocation8 + $0x300] sm:$0xff]
    %v1357 = vld [vmem:[#allocation8 + $0x308] sm:$0xff]
    %v1358 = vld [vmem:[#allocation8 + $0x310] sm:$0xff]
    %v1359 = vld [vmem:[#allocation8 + $0x318] sm:$0xff]
    %v1360 = vld [vmem:[#allocation8 + $0x320] sm:$0xff]
    %v1361 = vld [vmem:[#allocation8 + $0x328] sm:$0xff]
    %v1362 = vld [vmem:[#allocation8 + $0x330] sm:$0xff]
    %v1363 = vld [vmem:[#allocation8 + $0x338] sm:$0xff]
    %v1364 = vld [vmem:[#allocation8 + $0x340] sm:$0xff]
    %v1365 = vld [vmem:[#allocation8 + $0x348] sm:$0xff]
    %v1366 = vld [vmem:[#allocation8 + $0x350] sm:$0xff]
    %v1367 = vld [vmem:[#allocation8 + $0x358] sm:$0xff]
    %v1368 = vld [vmem:[#allocation8 + $0x360] sm:$0xff]
    %v1369 = vld [vmem:[#allocation8 + $0x368] sm:$0xff]
    %v1370 = vld [vmem:[#allocation8 + $0x370] sm:$0xff]
    %v1371 = vld [vmem:[#allocation8 + $0x378] sm:$0xff]
    %v1372 = vld [vmem:[#allocation8 + $0x380] sm:$0xff]
    %v1373 = vld [vmem:[#allocation8 + $0x388] sm:$0xff]
    %v1374 = vld [vmem:[#allocation8 + $0x390] sm:$0xff]
    %v1375 = vld [vmem:[#allocation8 + $0x398] sm:$0xff]
    %v1376 = vld [vmem:[#allocation8 + $0x3a0] sm:$0xff]
    %v1377 = vld [vmem:[#allocation8 + $0x3a8] sm:$0xff]
    %v1378 = vld [vmem:[#allocation8 + $0x3b0] sm:$0xff]
    %v1379 = vld [vmem:[#allocation8 + $0x3b8] sm:$0xff]
    %v1380 = vld [vmem:[#allocation8 + $0x3c0] sm:$0xff]
    %v1381 = vld [vmem:[#allocation8 + $0x3c8] sm:$0xff]
    %v1382 = vld [vmem:[#allocation8 + $0x3d0] sm:$0xff]
    %v1383 = vld [vmem:[#allocation8 + $0x3d8] sm:$0xff]
    %v1384 = vld [vmem:[#allocation8 + $0x3e0] sm:$0xff]
    %v1385 = vld [vmem:[#allocation8 + $0x3e8] sm:$0xff]
    %v1386 = vld [vmem:[#allocation8 + $0x3f0] sm:$0xff]
    %v1387 = vld [vmem:[#allocation8 + $0x3f8] sm:$0xff]
    %v1388 = vld [vmem:[%s4] sm:$0x3]
    %v1390 = vlaneseq
    %v1391 = vshrl.u32 %v1390, 7
    %v1392 = vsub.s32 0, %v1391
    %v1393 = vrot.slane %v1388, %v1392
    %v1394 = vlaneseq
    %v1395 = vshrl.u32 %v1394, 7
    %v1396 = vsub.s32 1, %v1395
    %v1397 = vrot.slane %v1388, %v1396
    %v1528 = vunpack.c.l.b16 %v1260
    %v1529 = vunpack.c.h.b16 %v1260
    %v1530 = vunpack.c.l.b16 %v1261
    %v1531 = vunpack.c.h.b16 %v1261
    %v1532 = vunpack.c.l.b16 %v1262
    %v1533 = vunpack.c.h.b16 %v1262
    %v1534 = vunpack.c.l.b16 %v1263
    %v1535 = vunpack.c.h.b16 %v1263
    %v1536 = vunpack.c.l.b16 %v1264
    %v1537 = vunpack.c.h.b16 %v1264
    %v1538 = vunpack.c.l.b16 %v1265
    %v1539 = vunpack.c.h.b16 %v1265
    %v1540 = vunpack.c.l.b16 %v1266
    %v1541 = vunpack.c.h.b16 %v1266
    %v1542 = vunpack.c.l.b16 %v1267
    %v1543 = vunpack.c.h.b16 %v1267
    %v1544 = vunpack.c.l.b16 %v1268
    %v1545 = vunpack.c.h.b16 %v1268
    %v1546 = vunpack.c.l.b16 %v1269
    %v1547 = vunpack.c.h.b16 %v1269
    %v1548 = vunpack.c.l.b16 %v1270
    %v1549 = vunpack.c.h.b16 %v1270
    %v1550 = vunpack.c.l.b16 %v1271
    %v1551 = vunpack.c.h.b16 %v1271
    %v1552 = vunpack.c.l.b16 %v1272
    %v1553 = vunpack.c.h.b16 %v1272
    %v1554 = vunpack.c.l.b16 %v1273
    %v1555 = vunpack.c.h.b16 %v1273
    %v1556 = vunpack.c.l.b16 %v1274
    %v1557 = vunpack.c.h.b16 %v1274
    %v1558 = vunpack.c.l.b16 %v1275
    %v1559 = vunpack.c.h.b16 %v1275
    %v1560 = vunpack.c.l.b16 %v1276
    %v1561 = vunpack.c.h.b16 %v1276
    %v1562 = vunpack.c.l.b16 %v1277
    %v1563 = vunpack.c.h.b16 %v1277
    %v1564 = vunpack.c.l.b16 %v1278
    %v1565 = vunpack.c.h.b16 %v1278
    %v1566 = vunpack.c.l.b16 %v1279
    %v1567 = vunpack.c.h.b16 %v1279
    %v1568 = vunpack.c.l.b16 %v1280
    %v1569 = vunpack.c.h.b16 %v1280
    %v1570 = vunpack.c.l.b16 %v1281
    %v1571 = vunpack.c.h.b16 %v1281
    %v1572 = vunpack.c.l.b16 %v1282
    %v1573 = vunpack.c.h.b16 %v1282
    %v1574 = vunpack.c.l.b16 %v1283
    %v1575 = vunpack.c.h.b16 %v1283
    %v1576 = vunpack.c.l.b16 %v1284
    %v1577 = vunpack.c.h.b16 %v1284
    %v1578 = vunpack.c.l.b16 %v1285
    %v1579 = vunpack.c.h.b16 %v1285
    %v1580 = vunpack.c.l.b16 %v1286
    %v1581 = vunpack.c.h.b16 %v1286
    %v1582 = vunpack.c.l.b16 %v1287
    %v1583 = vunpack.c.h.b16 %v1287
    %v1584 = vunpack.c.l.b16 %v1288
    %v1585 = vunpack.c.h.b16 %v1288
    %v1586 = vunpack.c.l.b16 %v1289
    %v1587 = vunpack.c.h.b16 %v1289
    %v1588 = vunpack.c.l.b16 %v1290
    %v1589 = vunpack.c.h.b16 %v1290
    %v1590 = vunpack.c.l.b16 %v1291
    %v1591 = vunpack.c.h.b16 %v1291
    %v1592 = vunpack.c.l.b16 %v1292
    %v1593 = vunpack.c.h.b16 %v1292
    %v1594 = vunpack.c.l.b16 %v1293
    %v1595 = vunpack.c.h.b16 %v1293
    %v1596 = vunpack.c.l.b16 %v1294
    %v1597 = vunpack.c.h.b16 %v1294
    %v1598 = vunpack.c.l.b16 %v1295
    %v1599 = vunpack.c.h.b16 %v1295
    %v1600 = vunpack.c.l.b16 %v1296
    %v1601 = vunpack.c.h.b16 %v1296
    %v1602 = vunpack.c.l.b16 %v1297
    %v1603 = vunpack.c.h.b16 %v1297
    %v1604 = vunpack.c.l.b16 %v1298
    %v1605 = vunpack.c.h.b16 %v1298
    %v1606 = vunpack.c.l.b16 %v1299
    %v1607 = vunpack.c.h.b16 %v1299
    %v1608 = vunpack.c.l.b16 %v1300
    %v1609 = vunpack.c.h.b16 %v1300
    %v1610 = vunpack.c.l.b16 %v1301
    %v1611 = vunpack.c.h.b16 %v1301
    %v1612 = vunpack.c.l.b16 %v1302
    %v1613 = vunpack.c.h.b16 %v1302
    %v1614 = vunpack.c.l.b16 %v1303
    %v1615 = vunpack.c.h.b16 %v1303
    %v1616 = vunpack.c.l.b16 %v1304
    %v1617 = vunpack.c.h.b16 %v1304
    %v1618 = vunpack.c.l.b16 %v1305
    %v1619 = vunpack.c.h.b16 %v1305
    %v1620 = vunpack.c.l.b16 %v1306
    %v1621 = vunpack.c.h.b16 %v1306
    %v1622 = vunpack.c.l.b16 %v1307
    %v1623 = vunpack.c.h.b16 %v1307
    %v1624 = vunpack.c.l.b16 %v1308
    %v1625 = vunpack.c.h.b16 %v1308
    %v1626 = vunpack.c.l.b16 %v1309
    %v1627 = vunpack.c.h.b16 %v1309
    %v1628 = vunpack.c.l.b16 %v1310
    %v1629 = vunpack.c.h.b16 %v1310
    %v1630 = vunpack.c.l.b16 %v1311
    %v1631 = vunpack.c.h.b16 %v1311
    %v1632 = vunpack.c.l.b16 %v1312
    %v1633 = vunpack.c.h.b16 %v1312
    %v1634 = vunpack.c.l.b16 %v1313
    %v1635 = vunpack.c.h.b16 %v1313
    %v1636 = vunpack.c.l.b16 %v1314
    %v1637 = vunpack.c.h.b16 %v1314
    %v1638 = vunpack.c.l.b16 %v1315
    %v1639 = vunpack.c.h.b16 %v1315
    %v1640 = vunpack.c.l.b16 %v1316
    %v1641 = vunpack.c.h.b16 %v1316
    %v1642 = vunpack.c.l.b16 %v1317
    %v1643 = vunpack.c.h.b16 %v1317
    %v1644 = vunpack.c.l.b16 %v1318
    %v1645 = vunpack.c.h.b16 %v1318
    %v1646 = vunpack.c.l.b16 %v1319
    %v1647 = vunpack.c.h.b16 %v1319
    %v1648 = vunpack.c.l.b16 %v1320
    %v1649 = vunpack.c.h.b16 %v1320
    %v1650 = vunpack.c.l.b16 %v1321
    %v1651 = vunpack.c.h.b16 %v1321
    %v1652 = vunpack.c.l.b16 %v1322
    %v1653 = vunpack.c.h.b16 %v1322
    %v1654 = vunpack.c.l.b16 %v1323
    %v1655 = vunpack.c.h.b16 %v1323
    %v1656 = vunpack.c.l.b16 %v1324
    %v1657 = vunpack.c.h.b16 %v1324
    %v1658 = vunpack.c.l.b16 %v1325
    %v1659 = vunpack.c.h.b16 %v1325
    %v1660 = vunpack.c.l.b16 %v1326
    %v1661 = vunpack.c.h.b16 %v1326
    %v1662 = vunpack.c.l.b16 %v1327
    %v1663 = vunpack.c.h.b16 %v1327
    %v1664 = vunpack.c.l.b16 %v1328
    %v1665 = vunpack.c.h.b16 %v1328
    %v1666 = vunpack.c.l.b16 %v1329
    %v1667 = vunpack.c.h.b16 %v1329
    %v1668 = vunpack.c.l.b16 %v1330
    %v1669 = vunpack.c.h.b16 %v1330
    %v1670 = vunpack.c.l.b16 %v1331
    %v1671 = vunpack.c.h.b16 %v1331
    %v1672 = vunpack.c.l.b16 %v1332
    %v1673 = vunpack.c.h.b16 %v1332
    %v1674 = vunpack.c.l.b16 %v1333
    %v1675 = vunpack.c.h.b16 %v1333
    %v1676 = vunpack.c.l.b16 %v1334
    %v1677 = vunpack.c.h.b16 %v1334
    %v1678 = vunpack.c.l.b16 %v1335
    %v1679 = vunpack.c.h.b16 %v1335
    %v1680 = vunpack.c.l.b16 %v1336
    %v1681 = vunpack.c.h.b16 %v1336
    %v1682 = vunpack.c.l.b16 %v1337
    %v1683 = vunpack.c.h.b16 %v1337
    %v1684 = vunpack.c.l.b16 %v1338
    %v1685 = vunpack.c.h.b16 %v1338
    %v1686 = vunpack.c.l.b16 %v1339
    %v1687 = vunpack.c.h.b16 %v1339
    %v1688 = vunpack.c.l.b16 %v1340
    %v1689 = vunpack.c.h.b16 %v1340
    %v1690 = vunpack.c.l.b16 %v1341
    %v1691 = vunpack.c.h.b16 %v1341
    %v1692 = vunpack.c.l.b16 %v1342
    %v1693 = vunpack.c.h.b16 %v1342
    %v1694 = vunpack.c.l.b16 %v1343
    %v1695 = vunpack.c.h.b16 %v1343
    %v1696 = vunpack.c.l.b16 %v1344
    %v1697 = vunpack.c.h.b16 %v1344
    %v1698 = vunpack.c.l.b16 %v1345
    %v1699 = vunpack.c.h.b16 %v1345
    %v1700 = vunpack.c.l.b16 %v1346
    %v1701 = vunpack.c.h.b16 %v1346
    %v1702 = vunpack.c.l.b16 %v1347
    %v1703 = vunpack.c.h.b16 %v1347
    %v1704 = vunpack.c.l.b16 %v1348
    %v1705 = vunpack.c.h.b16 %v1348
    %v1706 = vunpack.c.l.b16 %v1349
    %v1707 = vunpack.c.h.b16 %v1349
    %v1708 = vunpack.c.l.b16 %v1350
    %v1709 = vunpack.c.h.b16 %v1350
    %v1710 = vunpack.c.l.b16 %v1351
    %v1711 = vunpack.c.h.b16 %v1351
    %v1712 = vunpack.c.l.b16 %v1352
    %v1713 = vunpack.c.h.b16 %v1352
    %v1714 = vunpack.c.l.b16 %v1353
    %v1715 = vunpack.c.h.b16 %v1353
    %v1716 = vunpack.c.l.b16 %v1354
    %v1717 = vunpack.c.h.b16 %v1354
    %v1718 = vunpack.c.l.b16 %v1355
    %v1719 = vunpack.c.h.b16 %v1355
    %v1720 = vunpack.c.l.b16 %v1356
    %v1721 = vunpack.c.h.b16 %v1356
    %v1722 = vunpack.c.l.b16 %v1357
    %v1723 = vunpack.c.h.b16 %v1357
    %v1724 = vunpack.c.l.b16 %v1358
    %v1725 = vunpack.c.h.b16 %v1358
    %v1726 = vunpack.c.l.b16 %v1359
    %v1727 = vunpack.c.h.b16 %v1359
    %v1728 = vunpack.c.l.b16 %v1360
    %v1729 = vunpack.c.h.b16 %v1360
    %v1730 = vunpack.c.l.b16 %v1361
    %v1731 = vunpack.c.h.b16 %v1361
    %v1732 = vunpack.c.l.b16 %v1362
    %v1733 = vunpack.c.h.b16 %v1362
    %v1734 = vunpack.c.l.b16 %v1363
    %v1735 = vunpack.c.h.b16 %v1363
    %v1736 = vunpack.c.l.b16 %v1364
    %v1737 = vunpack.c.h.b16 %v1364
    %v1738 = vunpack.c.l.b16 %v1365
    %v1739 = vunpack.c.h.b16 %v1365
    %v1740 = vunpack.c.l.b16 %v1366
    %v1741 = vunpack.c.h.b16 %v1366
    %v1742 = vunpack.c.l.b16 %v1367
    %v1743 = vunpack.c.h.b16 %v1367
    %v1744 = vunpack.c.l.b16 %v1368
    %v1745 = vunpack.c.h.b16 %v1368
    %v1746 = vunpack.c.l.b16 %v1369
    %v1747 = vunpack.c.h.b16 %v1369
    %v1748 = vunpack.c.l.b16 %v1370
    %v1749 = vunpack.c.h.b16 %v1370
    %v1750 = vunpack.c.l.b16 %v1371
    %v1751 = vunpack.c.h.b16 %v1371
    %v1752 = vunpack.c.l.b16 %v1372
    %v1753 = vunpack.c.h.b16 %v1372
    %v1754 = vunpack.c.l.b16 %v1373
    %v1755 = vunpack.c.h.b16 %v1373
    %v1756 = vunpack.c.l.b16 %v1374
    %v1757 = vunpack.c.h.b16 %v1374
    %v1758 = vunpack.c.l.b16 %v1375
    %v1759 = vunpack.c.h.b16 %v1375
    %v1760 = vunpack.c.l.b16 %v1376
    %v1761 = vunpack.c.h.b16 %v1376
    %v1762 = vunpack.c.l.b16 %v1377
    %v1763 = vunpack.c.h.b16 %v1377
    %v1764 = vunpack.c.l.b16 %v1378
    %v1765 = vunpack.c.h.b16 %v1378
    %v1766 = vunpack.c.l.b16 %v1379
    %v1767 = vunpack.c.h.b16 %v1379
    %v1768 = vunpack.c.l.b16 %v1380
    %v1769 = vunpack.c.h.b16 %v1380
    %v1770 = vunpack.c.l.b16 %v1381
    %v1771 = vunpack.c.h.b16 %v1381
    %v1772 = vunpack.c.l.b16 %v1382
    %v1773 = vunpack.c.h.b16 %v1382
    %v1774 = vunpack.c.l.b16 %v1383
    %v1775 = vunpack.c.h.b16 %v1383
    %v1776 = vunpack.c.l.b16 %v1384
    %v1777 = vunpack.c.h.b16 %v1384
    %v1778 = vunpack.c.l.b16 %v1385
    %v1779 = vunpack.c.h.b16 %v1385
    %v1780 = vunpack.c.l.b16 %v1386
    %v1781 = vunpack.c.h.b16 %v1386
    %v1782 = vunpack.c.l.b16 %v1387
    %v1783 = vunpack.c.h.b16 %v1387
    %v1784 = vpack.c.b16 %v1530, %v1528
    %v1785 = vpack.c.b16 %v1531, %v1529
    %v1786 = vpack.c.b16 %v1534, %v1532
    %v1787 = vpack.c.b16 %v1535, %v1533
    %v1788 = vpack.c.b16 %v1538, %v1536
    %v1789 = vpack.c.b16 %v1539, %v1537
    %v1790 = vpack.c.b16 %v1542, %v1540
    %v1791 = vpack.c.b16 %v1543, %v1541
    %v1792 = vpack.c.b16 %v1546, %v1544
    %v1793 = vpack.c.b16 %v1547, %v1545
    %v1794 = vpack.c.b16 %v1550, %v1548
    %v1795 = vpack.c.b16 %v1551, %v1549
    %v1796 = vpack.c.b16 %v1554, %v1552
    %v1797 = vpack.c.b16 %v1555, %v1553
    %v1798 = vpack.c.b16 %v1558, %v1556
    %v1799 = vpack.c.b16 %v1559, %v1557
    %v1800 = vpack.c.b16 %v1562, %v1560
    %v1801 = vpack.c.b16 %v1563, %v1561
    %v1802 = vpack.c.b16 %v1566, %v1564
    %v1803 = vpack.c.b16 %v1567, %v1565
    %v1804 = vpack.c.b16 %v1570, %v1568
    %v1805 = vpack.c.b16 %v1571, %v1569
    %v1806 = vpack.c.b16 %v1574, %v1572
    %v1807 = vpack.c.b16 %v1575, %v1573
    %v1808 = vpack.c.b16 %v1578, %v1576
    %v1809 = vpack.c.b16 %v1579, %v1577
    %v1810 = vpack.c.b16 %v1582, %v1580
    %v1811 = vpack.c.b16 %v1583, %v1581
    %v1812 = vpack.c.b16 %v1586, %v1584
    %v1813 = vpack.c.b16 %v1587, %v1585
    %v1814 = vpack.c.b16 %v1590, %v1588
    %v1815 = vpack.c.b16 %v1591, %v1589
    %v1816 = vpack.c.b16 %v1594, %v1592
    %v1817 = vpack.c.b16 %v1595, %v1593
    %v1818 = vpack.c.b16 %v1598, %v1596
    %v1819 = vpack.c.b16 %v1599, %v1597
    %v1820 = vpack.c.b16 %v1602, %v1600
    %v1821 = vpack.c.b16 %v1603, %v1601
    %v1822 = vpack.c.b16 %v1606, %v1604
    %v1823 = vpack.c.b16 %v1607, %v1605
    %v1824 = vpack.c.b16 %v1610, %v1608
    %v1825 = vpack.c.b16 %v1611, %v1609
    %v1826 = vpack.c.b16 %v1614, %v1612
    %v1827 = vpack.c.b16 %v1615, %v1613
    %v1828 = vpack.c.b16 %v1618, %v1616
    %v1829 = vpack.c.b16 %v1619, %v1617
    %v1830 = vpack.c.b16 %v1622, %v1620
    %v1831 = vpack.c.b16 %v1623, %v1621
    %v1832 = vpack.c.b16 %v1626, %v1624
    %v1833 = vpack.c.b16 %v1627, %v1625
    %v1834 = vpack.c.b16 %v1630, %v1628
    %v1835 = vpack.c.b16 %v1631, %v1629
    %v1836 = vpack.c.b16 %v1634, %v1632
    %v1837 = vpack.c.b16 %v1635, %v1633
    %v1838 = vpack.c.b16 %v1638, %v1636
    %v1839 = vpack.c.b16 %v1639, %v1637
    %v1840 = vpack.c.b16 %v1642, %v1640
    %v1841 = vpack.c.b16 %v1643, %v1641
    %v1842 = vpack.c.b16 %v1646, %v1644
    %v1843 = vpack.c.b16 %v1647, %v1645
    %v1844 = vpack.c.b16 %v1650, %v1648
    %v1845 = vpack.c.b16 %v1651, %v1649
    %v1846 = vpack.c.b16 %v1654, %v1652
    %v1847 = vpack.c.b16 %v1655, %v1653
    %v1848 = vpack.c.b16 %v1658, %v1656
    %v1849 = vpack.c.b16 %v1659, %v1657
    %v1850 = vpack.c.b16 %v1662, %v1660
    %v1851 = vpack.c.b16 %v1663, %v1661
    %v1852 = vpack.c.b16 %v1666, %v1664
    %v1853 = vpack.c.b16 %v1667, %v1665
    %v1854 = vpack.c.b16 %v1670, %v1668
    %v1855 = vpack.c.b16 %v1671, %v1669
    %v1856 = vpack.c.b16 %v1674, %v1672
    %v1857 = vpack.c.b16 %v1675, %v1673
    %v1858 = vpack.c.b16 %v1678, %v1676
    %v1859 = vpack.c.b16 %v1679, %v1677
    %v1860 = vpack.c.b16 %v1682, %v1680
    %v1861 = vpack.c.b16 %v1683, %v1681
    %v1862 = vpack.c.b16 %v1686, %v1684
    %v1863 = vpack.c.b16 %v1687, %v1685
    %v1864 = vpack.c.b16 %v1690, %v1688
    %v1865 = vpack.c.b16 %v1691, %v1689
    %v1866 = vpack.c.b16 %v1694, %v1692
    %v1867 = vpack.c.b16 %v1695, %v1693
    %v1868 = vpack.c.b16 %v1698, %v1696
    %v1869 = vpack.c.b16 %v1699, %v1697
    %v1870 = vpack.c.b16 %v1702, %v1700
    %v1871 = vpack.c.b16 %v1703, %v1701
    %v1872 = vpack.c.b16 %v1706, %v1704
    %v1873 = vpack.c.b16 %v1707, %v1705
    %v1874 = vpack.c.b16 %v1710, %v1708
    %v1875 = vpack.c.b16 %v1711, %v1709
    %v1876 = vpack.c.b16 %v1714, %v1712
    %v1877 = vpack.c.b16 %v1715, %v1713
    %v1878 = vpack.c.b16 %v1718, %v1716
    %v1879 = vpack.c.b16 %v1719, %v1717
    %v1880 = vpack.c.b16 %v1722, %v1720
    %v1881 = vpack.c.b16 %v1723, %v1721
    %v1882 = vpack.c.b16 %v1726, %v1724
    %v1883 = vpack.c.b16 %v1727, %v1725
    %v1884 = vpack.c.b16 %v1730, %v1728
    %v1885 = vpack.c.b16 %v1731, %v1729
    %v1886 = vpack.c.b16 %v1734, %v1732
    %v1887 = vpack.c.b16 %v1735, %v1733
    %v1888 = vpack.c.b16 %v1738, %v1736
    %v1889 = vpack.c.b16 %v1739, %v1737
    %v1890 = vpack.c.b16 %v1742, %v1740
    %v1891 = vpack.c.b16 %v1743, %v1741
    %v1892 = vpack.c.b16 %v1746, %v1744
    %v1893 = vpack.c.b16 %v1747, %v1745
    %v1894 = vpack.c.b16 %v1750, %v1748
    %v1895 = vpack.c.b16 %v1751, %v1749
    %v1896 = vpack.c.b16 %v1754, %v1752
    %v1897 = vpack.c.b16 %v1755, %v1753
    %v1898 = vpack.c.b16 %v1758, %v1756
    %v1899 = vpack.c.b16 %v1759, %v1757
    %v1900 = vpack.c.b16 %v1762, %v1760
    %v1901 = vpack.c.b16 %v1763, %v1761
    %v1902 = vpack.c.b16 %v1766, %v1764
    %v1903 = vpack.c.b16 %v1767, %v1765
    %v1904 = vpack.c.b16 %v1770, %v1768
    %v1905 = vpack.c.b16 %v1771, %v1769
    %v1906 = vpack.c.b16 %v1774, %v1772
    %v1907 = vpack.c.b16 %v1775, %v1773
    %v1908 = vpack.c.b16 %v1778, %v1776
    %v1909 = vpack.c.b16 %v1779, %v1777
    %v1910 = vpack.c.b16 %v1782, %v1780
    %v1911 = vpack.c.b16 %v1783, %v1781
    %2040 = vmatprep.subr.bf16.mxu0 %v1799
    %2041 = vmatpush1.bf16.msra.mxu0 %v1798
    %2042 = vmatprep.subr.bf16.mxu0 %v1797
    %2043 = vmatpush1.bf16.msra.mxu0 %v1796
    %2044 = vmatprep.subr.bf16.mxu0 %v1795
    %2045 = vmatpush1.bf16.msra.mxu0 %v1794
    %2046 = vmatprep.subr.bf16.mxu0 %v1793
    %2047 = vmatpush1.bf16.msra.mxu0 %v1792
    %2048 = vmatprep.subr.bf16.mxu0 %v1791
    %2049 = vmatpush1.bf16.msra.mxu0 %v1790
    %2050 = vmatprep.subr.bf16.mxu0 %v1789
    %2051 = vmatpush1.bf16.msra.mxu0 %v1788
    %2052 = vmatprep.subr.bf16.mxu0 %v1787
    %2053 = vmatpush1.bf16.msra.mxu0 %v1786
    %2054 = vmatprep.subr.bf16.mxu0 %v1785
    %2055 = vmatpush1.bf16.msra.mxu0 %v1784
    %2056 = vmatprep.subr.bf16.mxu0 %v1815
    %2057 = vmatpush2.bf16.msra.mxu0 %v1814
    %2058 = vmatprep.subr.bf16.mxu0 %v1813
    %2059 = vmatpush2.bf16.msra.mxu0 %v1812
    %2060 = vmatprep.subr.bf16.mxu0 %v1811
    %2061 = vmatpush2.bf16.msra.mxu0 %v1810
    %2062 = vmatprep.subr.bf16.mxu0 %v1809
    %2063 = vmatpush2.bf16.msra.mxu0 %v1808
    %2064 = vmatprep.subr.bf16.mxu0 %v1807
    %2065 = vmatpush2.bf16.msra.mxu0 %v1806
    %2066 = vmatprep.subr.bf16.mxu0 %v1805
    %2067 = vmatpush2.bf16.msra.mxu0 %v1804
    %2068 = vmatprep.subr.bf16.mxu0 %v1803
    %2069 = vmatpush2.bf16.msra.mxu0 %v1802
    %2070 = vmatprep.subr.bf16.mxu0 %v1801
    %2071 = vmatpush2.bf16.msra.mxu0 %v1800
    %2072 = vmatprep.mubr.bf16.mxu0 %v1253
    %2073 = vmatmul.mubr.bf16.gmra.mxu0 %v1252
    %v2074 = vpop.f32.mrf.mxu0
    %v2075 = vadd.f32 %v1393, %v2074
    %v2076 = vpop.f32.mrf.mxu0
    %v2077 = vadd.f32 %v1397, %v2076
    %v2078 = vpop.f32.mrf.mxu0
    %v2079 = vpop.f32.mrf.mxu0
    %2080 = vdwg.mxu0
    %2081 = vmatprep.subr.bf16.mxu0 %v1831
    %2082 = vmatpush1.bf16.msra.mxu0 %v1830
    %2083 = vmatprep.subr.bf16.mxu0 %v1829
    %2084 = vmatpush1.bf16.msra.mxu0 %v1828
    %2085 = vmatprep.subr.bf16.mxu0 %v1827
    %2086 = vmatpush1.bf16.msra.mxu0 %v1826
    %2087 = vmatprep.subr.bf16.mxu0 %v1825
    %2088 = vmatpush1.bf16.msra.mxu0 %v1824
    %2089 = vmatprep.subr.bf16.mxu0 %v1823
    %2090 = vmatpush1.bf16.msra.mxu0 %v1822
    %2091 = vmatprep.subr.bf16.mxu0 %v1821
    %2092 = vmatpush1.bf16.msra.mxu0 %v1820
    %2093 = vmatprep.subr.bf16.mxu0 %v1819
    %2094 = vmatpush1.bf16.msra.mxu0 %v1818
    %2095 = vmatprep.subr.bf16.mxu0 %v1817
    %2096 = vmatpush1.bf16.msra.mxu0 %v1816
    %2097 = vmatprep.subr.bf16.mxu0 %v1847
    %2098 = vmatpush2.bf16.msra.mxu0 %v1846
    %2099 = vmatprep.subr.bf16.mxu0 %v1845
    %2100 = vmatpush2.bf16.msra.mxu0 %v1844
    %2101 = vmatprep.subr.bf16.mxu0 %v1843
    %2102 = vmatpush2.bf16.msra.mxu0 %v1842
    %2103 = vmatprep.subr.bf16.mxu0 %v1841
    %2104 = vmatpush2.bf16.msra.mxu0 %v1840
    %2105 = vmatprep.subr.bf16.mxu0 %v1839
    %2106 = vmatpush2.bf16.msra.mxu0 %v1838
    %2107 = vmatprep.subr.bf16.mxu0 %v1837
    %2108 = vmatpush2.bf16.msra.mxu0 %v1836
    %2109 = vmatprep.subr.bf16.mxu0 %v1835
    %2110 = vmatpush2.bf16.msra.mxu0 %v1834
    %2111 = vmatprep.subr.bf16.mxu0 %v1833
    %2112 = vmatpush2.bf16.msra.mxu0 %v1832
    %2113 = vmatprep.mubr.bf16.mxu0 %v1255
    %2114 = vmatmul.mubr.bf16.gmra.mxu0 %v1254
    %v2115 = vpop.f32.mrf.mxu0
    %v2116 = vadd.f32 %v2075, %v2115
    %v2117 = vpop.f32.mrf.mxu0
    %v2118 = vadd.f32 %v2077, %v2117
    %v2119 = vpop.f32.mrf.mxu0
    %v2120 = vpop.f32.mrf.mxu0
    %2121 = vdwg.mxu0
    %2122 = vmatprep.subr.bf16.mxu0 %v1863
    %2123 = vmatpush1.bf16.msra.mxu0 %v1862
    %2124 = vmatprep.subr.bf16.mxu0 %v1861
    %2125 = vmatpush1.bf16.msra.mxu0 %v1860
    %2126 = vmatprep.subr.bf16.mxu0 %v1859
    %2127 = vmatpush1.bf16.msra.mxu0 %v1858
    %2128 = vmatprep.subr.bf16.mxu0 %v1857
    %2129 = vmatpush1.bf16.msra.mxu0 %v1856
    %2130 = vmatprep.subr.bf16.mxu0 %v1855
    %2131 = vmatpush1.bf16.msra.mxu0 %v1854
    %2132 = vmatprep.subr.bf16.mxu0 %v1853
    %2133 = vmatpush1.bf16.msra.mxu0 %v1852
    %2134 = vmatprep.subr.bf16.mxu0 %v1851
    %2135 = vmatpush1.bf16.msra.mxu0 %v1850
    %2136 = vmatprep.subr.bf16.mxu0 %v1849
    %2137 = vmatpush1.bf16.msra.mxu0 %v1848
    %2138 = vmatprep.subr.bf16.mxu0 %v1879
    %2139 = vmatpush2.bf16.msra.mxu0 %v1878
    %2140 = vmatprep.subr.bf16.mxu0 %v1877
    %2141 = vmatpush2.bf16.msra.mxu0 %v1876
    %2142 = vmatprep.subr.bf16.mxu0 %v1875
    %2143 = vmatpush2.bf16.msra.mxu0 %v1874
    %2144 = vmatprep.subr.bf16.mxu0 %v1873
    %2145 = vmatpush2.bf16.msra.mxu0 %v1872
    %2146 = vmatprep.subr.bf16.mxu0 %v1871
    %2147 = vmatpush2.bf16.msra.mxu0 %v1870
    %2148 = vmatprep.subr.bf16.mxu0 %v1869
    %2149 = vmatpush2.bf16.msra.mxu0 %v1868
    %2150 = vmatprep.subr.bf16.mxu0 %v1867
    %2151 = vmatpush2.bf16.msra.mxu0 %v1866
    %2152 = vmatprep.subr.bf16.mxu0 %v1865
    %2153 = vmatpush2.bf16.msra.mxu0 %v1864
    %2154 = vmatprep.mubr.bf16.mxu0 %v1257
    %2155 = vmatmul.mubr.bf16.gmra.mxu0 %v1256
    %v2156 = vpop.f32.mrf.mxu0
    %v2157 = vadd.f32 %v2116, %v2156
    %v2158 = vpop.f32.mrf.mxu0
    %v2159 = vadd.f32 %v2118, %v2158
    %v2160 = vpop.f32.mrf.mxu0
    %v2161 = vpop.f32.mrf.mxu0
    %2162 = vdwg.mxu0
    %2163 = vmatprep.subr.bf16.mxu0 %v1895
    %2164 = vmatpush1.bf16.msra.mxu0 %v1894
    %2165 = vmatprep.subr.bf16.mxu0 %v1893
    %2166 = vmatpush1.bf16.msra.mxu0 %v1892
    %2167 = vmatprep.subr.bf16.mxu0 %v1891
    %2168 = vmatpush1.bf16.msra.mxu0 %v1890
    %2169 = vmatprep.subr.bf16.mxu0 %v1889
    %2170 = vmatpush1.bf16.msra.mxu0 %v1888
    %2171 = vmatprep.subr.bf16.mxu0 %v1887
    %2172 = vmatpush1.bf16.msra.mxu0 %v1886
    %2173 = vmatprep.subr.bf16.mxu0 %v1885
    %2174 = vmatpush1.bf16.msra.mxu0 %v1884
    %2175 = vmatprep.subr.bf16.mxu0 %v1883
    %2176 = vmatpush1.bf16.msra.mxu0 %v1882
    %2177 = vmatprep.subr.bf16.mxu0 %v1881
    %2178 = vmatpush1.bf16.msra.mxu0 %v1880
    %2179 = vmatprep.subr.bf16.mxu0 %v1911
    %2180 = vmatpush2.bf16.msra.mxu0 %v1910
    %2181 = vmatprep.subr.bf16.mxu0 %v1909
    %2182 = vmatpush2.bf16.msra.mxu0 %v1908
    %2183 = vmatprep.subr.bf16.mxu0 %v1907
    %2184 = vmatpush2.bf16.msra.mxu0 %v1906
    %2185 = vmatprep.subr.bf16.mxu0 %v1905
    %2186 = vmatpush2.bf16.msra.mxu0 %v1904
    %2187 = vmatprep.subr.bf16.mxu0 %v1903
    %2188 = vmatpush2.bf16.msra.mxu0 %v1902
    %2189 = vmatprep.subr.bf16.mxu0 %v1901
    %2190 = vmatpush2.bf16.msra.mxu0 %v1900
    %2191 = vmatprep.subr.bf16.mxu0 %v1899
    %2192 = vmatpush2.bf16.msra.mxu0 %v1898
    %2193 = vmatprep.subr.bf16.mxu0 %v1897
    %2194 = vmatpush2.bf16.msra.mxu0 %v1896
    %2195 = vmatprep.mubr.bf16.mxu0 %v1259
    %2196 = vmatmul.mubr.bf16.gmra.mxu0 %v1258
    %v2197 = vpop.f32.mrf.mxu0
    %v2198 = vadd.f32 %v2157, %v2197
    %v2199 = vpop.f32.mrf.mxu0
    %v2200 = vadd.f32 %v2159, %v2199
    %v2201 = vpop.f32.mrf.mxu0
    %v2202 = vpop.f32.mrf.mxu0
    %2203 = vdwg.mxu0
    %v2206 = vcombine.low %v2198, %v2200
    %v2208 = vunpack.c.l.s4 1983009808
    %v2209 = vunpack.c.0.s8 %v2208
    %v2210 = vlaneseq
    %v2211 = vshrl.u32 %v2210, 7
    %v2212 = vsub.s32 %v2209, %v2211
    %v2213 = vrot.slane %v2206, %v2212
    %2215 = vst [vmem:[#allocation10] sm:$0xf] %v2213
    // Predicated region
    $region38: #{tpu_custom_call.1} parent=1 // pred_check
      _
    $region39: #{tpu_custom_call.1} parent=1 // pred_check_branch
      %2217 = sbr.rel (0) target = $region41
    $region40: #{tpu_custom_call.1} parent=1 // pred_region
      %s2219 = ssub.s32 64, 64
      %2220 = vsyncadd [#allocation4], %s2219
      %s2222 = sshll.u32 [#allocation10], 4
      %s2223 = int_to_ptr.vmem [resolvable:$true] %s2222
      %2225 = dma.vmem_to_hbm [thread:$0]  %s2223, 64, %s5, [#allocation4]
    $region41: #{tpu_custom_call.1} parent=1 // pred_fallthru
      _
    // Predicated region
    $region42: #{tpu_custom_call.1} parent=1 // pred_check
      _
    $region43: #{tpu_custom_call.1} parent=1 // pred_check_branch
      %2227 = sbr.rel (0) target = $region45
    $region44: #{tpu_custom_call.1} parent=1 // pred_region
      %2228 = dma.done [#allocation4], 64
    $region45: #{tpu_custom_call.1} parent=1 // pred_fallthru
      _
    %2229 = vsyncpa [#allocation3], 1
    %2230 = vsyncpa [#allocation6], 1
    %2231 = vsyncpa [#allocation9], 1
    %2232 = vsyncpa [#allocation4], 1

</llo_original>
